<compile_context>
chip_gen: v5e
topology: v5e:2x2
jax: 0.10.0
libtpu: 0.0.40
codegen_flags: <defaults>
</compile_context>

<pallas_src>
import functools

import numpy as np
import jax
import jax.numpy as jnp
from jax.experimental import pallas as pl


# ----------------------------- fused kernel --------------------------------


def _fused_forward_kernel(x_ref, w4t_ref, wa_ref, wc_ref, bias_ref, o_ref, *,
                          layers):
  """Whole forward pass as a chain of six MXU matmuls.

  `layers` is a static tuple of (activation, pack_name, row_off, K, N, b_off)
  describing, per layer, which rows/cols of which packed bf16 weight buffer
  hold its (K, N) matrix and where its flattened bias lives in bias_ref.
  """
  packs = {"w4t": w4t_ref, "wa": wa_ref, "wc": wc_ref}
  h = x_ref[...]                                     # (B, F) float32
  for act, pack, r0, k_dim, n_out, b_off in layers:
    w = packs[pack][r0:r0 + k_dim, 0:n_out]          # static, tile-aligned slice
    z = jnp.dot(h.astype(jnp.bfloat16), w,
                preferred_element_type=jnp.float32)  # f32 accumulate
    z = z + bias_ref[:, b_off:b_off + n_out]         # (1, N) f32, broadcast on B
    if act == "sigmoid":
      h = jax.nn.sigmoid(z)
    elif act == "lrelu":                             # torch.nn.LeakyReLU(0.2)
      h = jnp.where(z >= 0.0, z, 0.2 * z)
    elif act == "hsig":                              # torch.nn.Hardsigmoid
      h = jnp.clip(z * (1.0 / 6.0) + 0.5, 0.0, 1.0)
    else:                                            # "none"
      h = z
  o_ref[...] = h                                     # (B, n*L_out) lane-dense


# --------------------------- params & prepack --------------------------------


def init_params(key, input_features, n):
  """Parameters in torch layouts (Linear: (out, in); Conv1d: (out, in, k)).

  lin2 / lin3 exist on the torch module but are unused in forward(), so they
  are not materialized.
  """
  def dense(key, fan_in, fan_out):
    k1, k2 = jax.random.split(key)
    bound = 1.0 / jnp.sqrt(fan_in)
    w = jax.random.uniform(k1, (fan_out, fan_in), jnp.float32, -bound, bound)
    b = jax.random.uniform(k2, (fan_out,), jnp.float32, -bound, bound)
    return w, b

  def conv(key, c_in, c_out, k=3):
    k1, k2 = jax.random.split(key)
    bound = 1.0 / jnp.sqrt(c_in * k)
    w = jax.random.uniform(k1, (c_out, c_in, k), jnp.float32, -bound, bound)
    b = jax.random.uniform(k2, (c_out,), jnp.float32, -bound, bound)
    return w, b

  keys = jax.random.split(key, 8)
  return {
      "lin1": dense(keys[0], input_features, input_features * 10),
      "lin4": dense(keys[1], input_features * 10, n * n * 9),
      "conv1": conv(keys[2], 3 * n, 2 * n),
      "conv2": conv(keys[3], 2 * n, 3 * n // 2),
      "conv3": conv(keys[4], 3 * n // 2, n),
      "conv4": conv(keys[5], n, n),
      "conv5": conv(keys[6], n, n),
      "conv6": conv(keys[7], n, n),
  }


def prepack_params(params, input_features, n):
  """One-time host-side repack.

  Convs -> banded (C_in*L_in, C_out*L_out) matrices (transposed for right
  multiplication), conv4..6 composed exactly, weights packed as bf16 into 3
  buffers with 16-row-aligned offsets, biases packed as one f32 row with
  128-lane-aligned offsets.
  """
  f_in = input_features
  h1 = 10 * f_in
  l0 = 3 * n                                     # conv1 input length (= 3n)

  def band_T(w, l_in, pad):
    """Conv1d(k, stride=1) as a (C_in*L_in, C_out*L_out) matrix (transposed)."""
    w = np.asarray(w, np.float64)                # (c_out, c_in, k)
    c_out, c_in, k = w.shape
    l_out = l_in + 2 * pad - k + 1
    m = np.zeros((c_in, l_in, c_out, l_out), np.float64)
    for kk in range(k):
      for l in range(l_out):
        src = l + kk - pad
        if 0 <= src < l_in:
          m[:, src, :, l] += w[:, :, kk].T       # (c_in, c_out)
    return m.reshape(c_in * l_in, c_out * l_out), l_out

  def flat_bias(b, l_out):
    return np.repeat(np.asarray(b, np.float64), l_out)

  m1t, l1 = band_T(params["conv1"][0], l0, 1)
  m2t, l2 = band_T(params["conv2"][0], l1, 0)
  m3t, l3 = band_T(params["conv3"][0], l2, 0)
  m4t, l4 = band_T(params["conv4"][0], l3, 0)
  m5t, l5 = band_T(params["conv5"][0], l4, 0)
  m6t, l6 = band_T(params["conv6"][0], l5, 0)

  c1f = flat_bias(params["conv1"][1], l1)
  c2f = flat_bias(params["conv2"][1], l2)
  c3f = flat_bias(params["conv3"][1], l3)
  c4f = flat_bias(params["conv4"][1], l4)
  c5f = flat_bias(params["conv5"][1], l5)
  c6f = flat_bias(params["conv6"][1], l6)

  # conv4 -> conv5 -> conv6 have no activation between them: exact composition.
  m456t = m4t @ m5t @ m6t
  c456f = c4f @ m5t @ m6t + c5f @ m6t + c6f

  w1, b1 = params["lin1"]
  w4, b4 = params["lin4"]
  w1t = np.asarray(w1, np.float64).T             # (F, 10F)
  w4t = np.asarray(w4, np.float64).T             # (10F, 9n^2)

  d0, d1, d2, d3, d6 = (w4t.shape[1], m1t.shape[1], m2t.shape[1],
                        m3t.shape[1], m456t.shape[1])

  def pack_rows(mats, align=16):
    """Row-stack matrices; offsets aligned to bf16 (16,128) sublane tiling."""
    width = max(m.shape[1] for m in mats)
    blocks, offs, row = [], [], 0
    for m in mats:
      r, c = m.shape
      rp = ((r + align - 1) // align) * align
      blk = np.zeros((rp, width), np.float64)
      blk[:r, :c] = m
      blocks.append(blk)
      offs.append(row)
      row += rp
    return np.concatenate(blocks, axis=0), offs

  def pack_lanes(vecs, align=128):
    """Concatenate 1-D biases into one (1, total) row, 128-lane aligned."""
    chunks, offs, off = [], [], 0
    for v in vecs:
      length = v.shape[0]
      lp = ((length + align - 1) // align) * align
      c = np.zeros((lp,), np.float64)
      c[:length] = v
      chunks.append(c)
      offs.append(off)
      off += lp
    return np.concatenate(chunks)[None, :], offs

  wa, (r_m1, r_m2) = pack_rows([m1t, m2t])                 # big conv bands
  wc, (r_w1, r_m3, r_m456) = pack_rows([w1t, m3t, m456t])  # small matrices
  bias, (b_l1, b_l4, b_c1, b_c2, b_c3, b_c456) = pack_lanes(
      [np.asarray(b1, np.float64), np.asarray(b4, np.float64),
       c1f, c2f, c3f, c456f])

  arrays = {
      "w4t": jnp.asarray(np.asarray(w4t, np.float32), jnp.bfloat16),
      "wa": jnp.asarray(np.asarray(wa, np.float32), jnp.bfloat16),
      "wc": jnp.asarray(np.asarray(wc, np.float32), jnp.bfloat16),
      "bias": jnp.asarray(np.asarray(bias, np.float32)),
  }
  # Static per-layer plan: (activation, pack, row_off, K, N, bias_off).
  layers = (
      ("sigmoid", "wc", int(r_w1), int(f_in), int(h1), int(b_l1)),    # lin1
      ("sigmoid", "w4t", 0, int(h1), int(d0), int(b_l4)),             # lin4
      ("lrelu", "wa", int(r_m1), int(d0), int(d1), int(b_c1)),        # conv1
      ("lrelu", "wa", int(r_m2), int(d1), int(d2), int(b_c2)),        # conv2
      ("lrelu", "wc", int(r_m3), int(d2), int(d3), int(b_c3)),        # conv3
      ("hsig", "wc", int(r_m456), int(d3), int(d6), int(b_c456)),     # conv4∘5∘6
  )
  return arrays, layers, int(l6)


# ------------------------------ forward --------------------------------------


@functools.partial(jax.jit, static_argnames=("layers", "n", "l_out"))
def model_forward(x, w4t, wa, wc, bias, *, layers, n, l_out):
  batch = x.shape[0]
  d_out = layers[-1][4]                          # n * l_out
  out2d = pl.pallas_call(
      functools.partial(_fused_forward_kernel, layers=layers),
      out_shape=jax.ShapeDtypeStruct((batch, d_out), jnp.float32),
  )(x, w4t, wa, wc, bias)
  # Lane-dense (B, n*L) slab from the kernel; restore (B, n, L) outside it.
  return out2d.reshape(batch, n, l_out)


# --------------------------- pure-JAX reference ------------------------------


def reference_forward(x, params, n):
  hp = jax.lax.Precision.HIGHEST
  w1, b1 = params["lin1"]
  h = jax.nn.sigmoid(jnp.dot(x, w1.T, precision=hp) + b1)
  w4, b4 = params["lin4"]
  h = jax.nn.sigmoid(jnp.dot(h, w4.T, precision=hp) + b4)
  a = h.reshape(x.shape[0], 3 * n, 3 * n)

  def conv1d(a, w, b, pad, act):
    if pad:
      a = jnp.pad(a, ((0, 0), (0, 0), (pad, pad)))
    c_out, _, k = w.shape
    l_out = a.shape[2] - k + 1
    y = b.reshape(1, c_out, 1) + sum(
        jnp.einsum("oc,bcl->bol", w[:, :, kk], a[:, :, kk:kk + l_out],
                   precision=hp) for kk in range(k))
    if act == "lrelu":
      y = jnp.where(y >= 0.0, y, 0.2 * y)
    elif act == "hsig":
      y = jnp.clip(y / 6.0 + 0.5, 0.0, 1.0)
    return y

  a = conv1d(a, *params["conv1"], pad=1, act="lrelu")
  a = conv1d(a, *params["conv2"], pad=0, act="lrelu")
  a = conv1d(a, *params["conv3"], pad=0, act="lrelu")
  a = conv1d(a, *params["conv4"], pad=0, act="none")
  a = conv1d(a, *params["conv5"], pad=0, act="none")
  a = conv1d(a, *params["conv6"], pad=0, act="hsig")
  return a


# -------------------------------- main ---------------------------------------


if __name__ == "__main__":
  input_features = 16
  n = 8
  batch = 2

  key = jax.random.PRNGKey(0)
  k_params, k_x = jax.random.split(key)
  params = init_params(k_params, input_features, n)
  arrays, layers, l_out = prepack_params(params, input_features, n)
  x = jax.random.normal(k_x, (batch, input_features), jnp.float32)

  out = jax.block_until_ready(
      model_forward(x, arrays["w4t"], arrays["wa"], arrays["wc"],
                    arrays["bias"], layers=layers, n=n, l_out=l_out))

  expected_shape = (batch, n, 3 * n - 10)
  assert out.shape == expected_shape, (out.shape, expected_shape)
  assert bool(jnp.all(jnp.isfinite(out)))
  assert bool(jnp.all((out >= 0.0) & (out <= 1.0)))   # hardsigmoid range

  ref = reference_forward(x, params, n)
  max_err = float(jnp.max(jnp.abs(out - ref)))
  assert max_err < 1e-2, f"mismatch vs pure-JAX reference: {max_err}"

  print("KERNEL_OK")
</pallas_src>

<mosaic_0001>
module attributes {stable_mosaic.version = 11 : i64} {
  func.func @_fused_forward_kernel(%arg0: memref<2x16xf32, #tpu.memory_space<vmem>>, %arg1: memref<160x576xbf16, #tpu.memory_space<vmem>>, %arg2: memref<960x384xbf16, #tpu.memory_space<vmem>>, %arg3: memref<448x160xbf16, #tpu.memory_space<vmem>>, %arg4: memref<1x2048xf32, #tpu.memory_space<vmem>>, %arg5: memref<2x112xf32, #tpu.memory_space<vmem>>) attributes {dimension_semantics = [], scalar_prefetch = 0 : i64, scratch_operands = 0 : i64, tpu.core_type = #tpu.core_type<tc>} {
    %c0 = arith.constant 0 : index
    %c0_0 = arith.constant 0 : index
    %0 = vector.load %arg0[%c0, %c0_0] : memref<2x16xf32, #tpu.memory_space<vmem>>, vector<2x16xf32>
    %c0_1 = arith.constant 0 : index
    %c0_2 = arith.constant 0 : index
    %1 = vector.load %arg3[%c0_1, %c0_2] : memref<448x160xbf16, #tpu.memory_space<vmem>>, vector<16x160xbf16>
    %2 = arith.truncf %0 : vector<2x16xf32> to vector<2x16xbf16>
    %cst = arith.constant dense<0.000000e+00> : vector<2x160xf32>
    %3 = tpu.matmul %2, %1, %cst {dimension_numbers = #tpu.dot_dimension_numbers<[1], [0], [0], [1], [0, 0, 1, 1], [], []>} : vector<2x16xbf16>, vector<16x160xbf16>, vector<2x160xf32> -> vector<2x160xf32>
    %c0_3 = arith.constant 0 : index
    %c0_4 = arith.constant 0 : index
    %4 = vector.load %arg4[%c0_3, %c0_4] : memref<1x2048xf32, #tpu.memory_space<vmem>>, vector<1x160xf32>
    %5 = vector.broadcast %4 : vector<1x160xf32> to vector<2x160xf32>
    %6 = arith.addf %3, %5 : vector<2x160xf32>
    %7 = arith.negf %6 : vector<2x160xf32>
    %8 = math.exp %7 : vector<2x160xf32>
    %cst_5 = arith.constant 1.000000e+00 : f32
    %9 = vector.broadcast %cst_5 : f32 to vector<2x160xf32>
    %10 = arith.addf %9, %8 : vector<2x160xf32>
    %11 = arith.divf %9, %10 : vector<2x160xf32>
    %c0_6 = arith.constant 0 : index
    %c0_7 = arith.constant 0 : index
    %12 = vector.load %arg1[%c0_6, %c0_7] : memref<160x576xbf16, #tpu.memory_space<vmem>>, vector<160x576xbf16>
    %13 = arith.truncf %11 : vector<2x160xf32> to vector<2x160xbf16>
    %cst_8 = arith.constant dense<0.000000e+00> : vector<2x576xf32>
    %14 = tpu.matmul %13, %12, %cst_8 {dimension_numbers = #tpu.dot_dimension_numbers<[1], [0], [0], [1], [0, 0, 1, 1], [], []>} : vector<2x160xbf16>, vector<160x576xbf16>, vector<2x576xf32> -> vector<2x576xf32>
    %c0_9 = arith.constant 0 : index
    %c256 = arith.constant 256 : index
    %15 = vector.load %arg4[%c0_9, %c256] : memref<1x2048xf32, #tpu.memory_space<vmem>>, vector<1x576xf32>
    %16 = vector.broadcast %15 : vector<1x576xf32> to vector<2x576xf32>
    %17 = arith.addf %14, %16 : vector<2x576xf32>
    %18 = arith.negf %17 : vector<2x576xf32>
    %19 = math.exp %18 : vector<2x576xf32>
    %cst_10 = arith.constant 1.000000e+00 : f32
    %20 = vector.broadcast %cst_10 : f32 to vector<2x576xf32>
    %21 = arith.addf %20, %19 : vector<2x576xf32>
    %22 = arith.divf %20, %21 : vector<2x576xf32>
    %c0_11 = arith.constant 0 : index
    %c0_12 = arith.constant 0 : index
    %23 = vector.load %arg2[%c0_11, %c0_12] : memref<960x384xbf16, #tpu.memory_space<vmem>>, vector<576x384xbf16>
    %24 = arith.truncf %22 : vector<2x576xf32> to vector<2x576xbf16>
    %cst_13 = arith.constant dense<0.000000e+00> : vector<2x384xf32>
    %25 = tpu.matmul %24, %23, %cst_13 {dimension_numbers = #tpu.dot_dimension_numbers<[1], [0], [0], [1], [0, 0, 1, 1], [], []>} : vector<2x576xbf16>, vector<576x384xbf16>, vector<2x384xf32> -> vector<2x384xf32>
    %c0_14 = arith.constant 0 : index
    %c896 = arith.constant 896 : index
    %26 = vector.load %arg4[%c0_14, %c896] : memref<1x2048xf32, #tpu.memory_space<vmem>>, vector<1x384xf32>
    %27 = vector.broadcast %26 : vector<1x384xf32> to vector<2x384xf32>
    %28 = arith.addf %25, %27 : vector<2x384xf32>
    %cst_15 = arith.constant 0.000000e+00 : f32
    %29 = vector.broadcast %cst_15 : f32 to vector<2x384xf32>
    %30 = arith.cmpf oge, %28, %29 : vector<2x384xf32>
    %cst_16 = arith.constant 2.000000e-01 : f32
    %31 = vector.broadcast %cst_16 : f32 to vector<2x384xf32>
    %32 = arith.mulf %31, %28 : vector<2x384xf32>
    %33 = arith.select %30, %28, %32 : vector<2x384xi1>, vector<2x384xf32>
    %c576 = arith.constant 576 : index
    %c0_17 = arith.constant 0 : index
    %34 = vector.load %arg2[%c576, %c0_17] : memref<960x384xbf16, #tpu.memory_space<vmem>>, vector<384x264xbf16>
    %35 = arith.truncf %33 : vector<2x384xf32> to vector<2x384xbf16>
    %cst_18 = arith.constant dense<0.000000e+00> : vector<2x264xf32>
    %36 = tpu.matmul %35, %34, %cst_18 {dimension_numbers = #tpu.dot_dimension_numbers<[1], [0], [0], [1], [0, 0, 1, 1], [], []>} : vector<2x384xbf16>, vector<384x264xbf16>, vector<2x264xf32> -> vector<2x264xf32>
    %c0_19 = arith.constant 0 : index
    %c1280 = arith.constant 1280 : index
    %37 = vector.load %arg4[%c0_19, %c1280] : memref<1x2048xf32, #tpu.memory_space<vmem>>, vector<1x264xf32>
    %38 = vector.broadcast %37 : vector<1x264xf32> to vector<2x264xf32>
    %39 = arith.addf %36, %38 : vector<2x264xf32>
    %cst_20 = arith.constant 0.000000e+00 : f32
    %40 = vector.broadcast %cst_20 : f32 to vector<2x264xf32>
    %41 = arith.cmpf oge, %39, %40 : vector<2x264xf32>
    %cst_21 = arith.constant 2.000000e-01 : f32
    %42 = vector.broadcast %cst_21 : f32 to vector<2x264xf32>
    %43 = arith.mulf %42, %39 : vector<2x264xf32>
    %44 = arith.select %41, %39, %43 : vector<2x264xi1>, vector<2x264xf32>
    %c16 = arith.constant 16 : index
    %c0_22 = arith.constant 0 : index
    %45 = vector.load %arg3[%c16, %c0_22] : memref<448x160xbf16, #tpu.memory_space<vmem>>, vector<264x160xbf16>
    %46 = arith.truncf %44 : vector<2x264xf32> to vector<2x264xbf16>
    %cst_23 = arith.constant dense<0.000000e+00> : vector<2x160xf32>
    %47 = tpu.matmul %46, %45, %cst_23 {dimension_numbers = #tpu.dot_dimension_numbers<[1], [0], [0], [1], [0, 0, 1, 1], [], []>} : vector<2x264xbf16>, vector<264x160xbf16>, vector<2x160xf32> -> vector<2x160xf32>
    %c0_24 = arith.constant 0 : index
    %c1664 = arith.constant 1664 : index
    %48 = vector.load %arg4[%c0_24, %c1664] : memref<1x2048xf32, #tpu.memory_space<vmem>>, vector<1x160xf32>
    %49 = vector.broadcast %48 : vector<1x160xf32> to vector<2x160xf32>
    %50 = arith.addf %47, %49 : vector<2x160xf32>
    %cst_25 = arith.constant 0.000000e+00 : f32
    %51 = vector.broadcast %cst_25 : f32 to vector<2x160xf32>
    %52 = arith.cmpf oge, %50, %51 : vector<2x160xf32>
    %cst_26 = arith.constant 2.000000e-01 : f32
    %53 = vector.broadcast %cst_26 : f32 to vector<2x160xf32>
    %54 = arith.mulf %53, %50 : vector<2x160xf32>
    %55 = arith.select %52, %50, %54 : vector<2x160xi1>, vector<2x160xf32>
    %c288 = arith.constant 288 : index
    %c0_27 = arith.constant 0 : index
    %56 = vector.load %arg3[%c288, %c0_27] : memref<448x160xbf16, #tpu.memory_space<vmem>>, vector<160x112xbf16>
    %57 = arith.truncf %55 : vector<2x160xf32> to vector<2x160xbf16>
    %cst_28 = arith.constant dense<0.000000e+00> : vector<2x112xf32>
    %58 = tpu.matmul %57, %56, %cst_28 {dimension_numbers = #tpu.dot_dimension_numbers<[1], [0], [0], [1], [0, 0, 1, 1], [], []>} : vector<2x160xbf16>, vector<160x112xbf16>, vector<2x112xf32> -> vector<2x112xf32>
    %c0_29 = arith.constant 0 : index
    %c1920 = arith.constant 1920 : index
    %59 = vector.load %arg4[%c0_29, %c1920] : memref<1x2048xf32, #tpu.memory_space<vmem>>, vector<1x112xf32>
    %60 = vector.broadcast %59 : vector<1x112xf32> to vector<2x112xf32>
    %61 = arith.addf %58, %60 : vector<2x112xf32>
    %cst_30 = arith.constant 0.166666672 : f32
    %62 = vector.broadcast %cst_30 : f32 to vector<2x112xf32>
    %63 = arith.mulf %61, %62 : vector<2x112xf32>
    %cst_31 = arith.constant 5.000000e-01 : f32
    %64 = vector.broadcast %cst_31 : f32 to vector<2x112xf32>
    %65 = arith.addf %63, %64 : vector<2x112xf32>
    %cst_32 = arith.constant 0.000000e+00 : f32
    %cst_33 = arith.constant 1.000000e+00 : f32
    %66 = vector.broadcast %cst_32 : f32 to vector<2x112xf32>
    %67 = arith.maximumf %66, %65 : vector<2x112xf32>
    %68 = vector.broadcast %cst_33 : f32 to vector<2x112xf32>
    %69 = arith.minimumf %68, %67 : vector<2x112xf32>
    %c0_34 = arith.constant 0 : index
    %c0_35 = arith.constant 0 : index
    %70 = vector.load %arg5[%c0_34, %c0_35] : memref<2x112xf32, #tpu.memory_space<vmem>>, vector<2x112xf32>
    tpu.vector_store %arg5[%c0_34, %c0_35], %69 {strides = array<i32>} : memref<2x112xf32, #tpu.memory_space<vmem>>, vector<2x112xf32>,
    return
  }
}

</mosaic_0001>

<llo_original>
// kernel: model_forward.1
$region0: #{model_forward.1}
  #allocation0 [shape = 'u32[]', space=smem, size = 0x4, offset = 0x4, fixed_abs, tag = 'smem constant byte address 0x4 - core index']
  #allocation1 [shape = 'u32[72,128]{1,0:T(1,128)}', space=vmem, size = 0x9000, scoped, tag = 'internal scratch']
  %s0 = inlined_call_operand.vmem [shape: f32[2,16], index: 0, kind: input, shape index: {}]
  %s1 = inlined_call_operand.vmem [shape: bf16[160,576], index: 1, kind: input, shape index: {}]
  %s2 = inlined_call_operand.hbm [shape: bf16[960,384], index: 2, kind: input, shape index: {}]
  %s3 = inlined_call_operand.vmem [shape: bf16[448,160], index: 3, kind: input, shape index: {}]
  %s4 = inlined_call_operand.vmem [shape: f32[1,2048], index: 4, kind: input, shape index: {}]
  %s5 = inlined_call_operand.vmem [shape: f32[2,112], index: 5, kind: output, shape index: {}]
  %s6 = sld [smem:[#allocation0]]
  $region34: #{model_forward.1} parent=0
    _
  %s8 = ssub.s32 1, %s6
  %s9 = scalar_select 0, %s8, %s6
  $region1: #{model_forward.1} parent=0
    #allocation2 [shape = 'u8[737280]{0}', space=vmem, size = 0xb4000, scoped, tag = 'input window, operand 2, single buffered']
    #allocation3 [shape = 's32[1]{0}', space=sflag, size = 0x4, scoped, tag = 'scoped memory for model_forward.1']
    %10 = vsyncpa [#allocation3], 0
    // Predicated region
    $region2: #{model_forward.1} parent=1 // pred_check
      _
    $region3: #{model_forward.1} parent=1 // pred_check_branch
      %12 = sbr.rel (0) target = $region5
    $region4: #{model_forward.1} parent=1 // pred_region
      _
    $region5: #{model_forward.1} parent=1 // pred_fallthru
      _
    // Predicated region
    $region6: #{model_forward.1} parent=1 // pred_check
      _
    $region7: #{model_forward.1} parent=1 // pred_check_branch
      %14 = sbr.rel (0) target = $region9
    $region8: #{model_forward.1} parent=1 // pred_region
      _
    $region9: #{model_forward.1} parent=1 // pred_fallthru
      _
    // Predicated region
    $region10: #{model_forward.1} parent=1 // pred_check
      _
    $region11: #{model_forward.1} parent=1 // pred_check_branch
      %16 = sbr.rel (0) target = $region13
    $region12: #{model_forward.1} parent=1 // pred_region
      %18 = vsyncadd [#allocation3], 0
      %s19 = sshll.u32 %s2, 4
      %s20 = int_to_ptr.hbm [resolvable:$true] %s19
      %s21 = sshll.u32 [#allocation2], 4
      %s22 = int_to_ptr.vmem [resolvable:$true] %s21
      %27 = dma.hbm_to_vmem [thread:$0]  %s20, 23040, %s22, [#allocation3], 192, 192, 12
    $region13: #{model_forward.1} parent=1 // pred_fallthru
      _
    // Predicated region
    $region14: #{model_forward.1} parent=1 // pred_check
      _
    $region15: #{model_forward.1} parent=1 // pred_check_branch
      %29 = sbr.rel (0) target = $region17
    $region16: #{model_forward.1} parent=1 // pred_region
      _
    $region17: #{model_forward.1} parent=1 // pred_fallthru
      _
    // Predicated region
    $region18: #{model_forward.1} parent=1 // pred_check
      _
    $region19: #{model_forward.1} parent=1 // pred_check_branch
      %31 = sbr.rel (0) target = $region21
    $region20: #{model_forward.1} parent=1 // pred_region
      _
    $region21: #{model_forward.1} parent=1 // pred_fallthru
      _
    // Predicated region
    $region22: #{model_forward.1} parent=1 // pred_check
      _
    $region23: #{model_forward.1} parent=1 // pred_check_branch
      %33 = sbr.rel (0) target = $region25
    $region24: #{model_forward.1} parent=1 // pred_region
      %35 = dma.done [#allocation3], 23040
    $region25: #{model_forward.1} parent=1 // pred_fallthru
      _
    %v37 = vld [vmem:[%s0] sm:$0x3]
    %v38 = vld [vmem:[%s3] sm:$0xff]
    %v39 = vld [vmem:[%s3 + $0x8] sm:$0xff]
    %v40 = vpack.c.bf16 %v37, %v37
    %v41 = vld [vmem:[%s4] sm:$0x3]
    %v43 = vperm.slane %v41, 0
    %v44 = vperm.slane %v41, 1
    %v49 = vunpack.c.l.b16 %v38
    %v50 = vunpack.c.h.b16 %v38
    %v51 = vunpack.c.l.b16 %v39
    %v52 = vunpack.c.h.b16 %v39
    %v53 = vpack.c.b16 %v51, %v49
    %v54 = vpack.c.b16 %v52, %v50
    %vm57 = vcmask 130048
    %v59 = vsel %vm57, %v40, 0
    %61 = vmatpush.bf16.msra.mxu0 0
    %62 = vmatpush.bf16.msra.mxu0 0
    %63 = vmatpush.bf16.msra.mxu0 0
    %64 = vmatpush.bf16.msra.mxu0 0
    %65 = vmatpush.bf16.msra.mxu0 0
    %66 = vmatpush.bf16.msra.mxu0 0
    %67 = vmatpush.bf16.msra.mxu0 0
    %68 = vmatpush.bf16.msra.mxu0 %v53
    %69 = vmatmul.bf16.gmra.mxu0 %v59
    %v70 = vpop.f32.mrf.mxu0
    %v71 = vadd.f32 %v43, %v70
    %v72 = vpop.f32.mrf.mxu0
    %73 = vdwg.mxu0
    %74 = vmatpush.bf16.msra.mxu0 0
    %75 = vmatpush.bf16.msra.mxu0 0
    %76 = vmatpush.bf16.msra.mxu0 0
    %77 = vmatpush.bf16.msra.mxu0 0
    %78 = vmatpush.bf16.msra.mxu0 0
    %79 = vmatpush.bf16.msra.mxu0 0
    %80 = vmatpush.bf16.msra.mxu0 0
    %81 = vmatpush.bf16.msra.mxu0 %v54
    %82 = vmatmul.bf16.gmra.mxu0 %v59
    %v83 = vpop.f32.mrf.mxu0
    %v84 = vadd.f32 %v44, %v83
    %v85 = vpop.f32.mrf.mxu0
    %86 = vdwg.mxu0
    %v87 = vxor.u32 %v71, 2147483648
    %v88 = vxor.u32 %v84, 2147483648
    %v89 = vmul.f32 %v87, 1.442695
    %v90 = vpow.pop %v89
    %v91 = vmul.f32 %v88, 1.442695
    %v92 = vpow.pop %v91
    %v93 = vadd.f32 %v90, 1.0
    %v94 = vadd.f32 %v92, 1.0
    %v95 = vrcp.pop %v93
    %v96 = vmul.f32 %v93, %v95
    %v97 = vsub.f32 1.0, %v96
    %v98 = vmul.f32 %v95, %v97
    %v99 = vadd.f32 %v95, %v98
    %vm100 = vweird.f32 %v93
    %vm101 = vweird.f32 %v95
    %vm102 = vmor %vm100, %vm101
    %v103 = vsel %vm102, %v95, %v99
    %v104 = vand.u32 2147483647, %v93
    %vm105 = vcmp.eq.f32.partialorder %v104, 8.507059e+37
    %v106 = vand.u32 %v93, 2147483648
    %v107 = vor.u32 1.1754944e-38, %v106
    %v108 = vsel %vm105, %v107, %v103
    %v109 = vmul.f32 1.0, %v108
    %v110 = vrcp.pop %v94
    %v111 = vmul.f32 %v94, %v110
    %v112 = vsub.f32 1.0, %v111
    %v113 = vmul.f32 %v110, %v112
    %v114 = vadd.f32 %v110, %v113
    %vm115 = vweird.f32 %v94
    %vm116 = vweird.f32 %v110
    %vm117 = vmor %vm115, %vm116
    %v118 = vsel %vm117, %v110, %v114
    %v119 = vand.u32 2147483647, %v94
    %vm120 = vcmp.eq.f32.partialorder %v119, 8.507059e+37
    %v121 = vand.u32 %v94, 2147483648
    %v122 = vor.u32 1.1754944e-38, %v121
    %v123 = vsel %vm120, %v122, %v118
    %v124 = vmul.f32 1.0, %v123
    %v125 = vld [vmem:[%s1] sm:$0xff]
    %v126 = vld [vmem:[%s1 + $0x8] sm:$0xff]
    %v127 = vld [vmem:[%s1 + $0x10] sm:$0xf]
    %v128 = vld [vmem:[%s1 + $0x14] sm:$0xff]
    %v129 = vld [vmem:[%s1 + $0x1c] sm:$0xff]
    %v130 = vld [vmem:[%s1 + $0x24] sm:$0xf]
    %v131 = vld [vmem:[%s1 + $0x28] sm:$0xff]
    %v132 = vld [vmem:[%s1 + $0x30] sm:$0xff]
    %v133 = vld [vmem:[%s1 + $0x38] sm:$0xf]
    %v134 = vld [vmem:[%s1 + $0x3c] sm:$0xff]
    %v135 = vld [vmem:[%s1 + $0x44] sm:$0xff]
    %v136 = vld [vmem:[%s1 + $0x4c] sm:$0xf]
    %v137 = vld [vmem:[%s1 + $0x50] sm:$0xff]
    %v138 = vld [vmem:[%s1 + $0x58] sm:$0xff]
    %v139 = vld [vmem:[%s1 + $0x60] sm:$0xf]
    %v140 = vld [vmem:[%s1 + $0x64] sm:$0xff]
    %v141 = vld [vmem:[%s1 + $0x6c] sm:$0xff]
    %v142 = vld [vmem:[%s1 + $0x74] sm:$0xf]
    %v143 = vld [vmem:[%s1 + $0x78] sm:$0xff]
    %v144 = vld [vmem:[%s1 + $0x80] sm:$0xff]
    %v145 = vld [vmem:[%s1 + $0x88] sm:$0xf]
    %v146 = vld [vmem:[%s1 + $0x8c] sm:$0xff]
    %v147 = vld [vmem:[%s1 + $0x94] sm:$0xff]
    %v148 = vld [vmem:[%s1 + $0x9c] sm:$0xf]
    %v149 = vld [vmem:[%s1 + $0xa0] sm:$0xff]
    %v150 = vld [vmem:[%s1 + $0xa8] sm:$0xff]
    %v151 = vld [vmem:[%s1 + $0xb0] sm:$0xf]
    %v152 = vld [vmem:[%s1 + $0xb4] sm:$0xff]
    %v153 = vld [vmem:[%s1 + $0xbc] sm:$0xff]
    %v154 = vld [vmem:[%s1 + $0xc4] sm:$0xf]
    %v155 = vld [vmem:[%s1 + $0xc8] sm:$0xff]
    %v156 = vld [vmem:[%s1 + $0xd0] sm:$0xff]
    %v157 = vld [vmem:[%s1 + $0xd8] sm:$0xf]
    %v158 = vld [vmem:[%s1 + $0xdc] sm:$0xff]
    %v159 = vld [vmem:[%s1 + $0xe4] sm:$0xff]
    %v160 = vld [vmem:[%s1 + $0xec] sm:$0xf]
    %v161 = vld [vmem:[%s1 + $0xf0] sm:$0xff]
    %v162 = vld [vmem:[%s1 + $0xf8] sm:$0xff]
    %v163 = vld [vmem:[%s1 + $0x100] sm:$0xf]
    %v164 = vld [vmem:[%s1 + $0x104] sm:$0xff]
    %v165 = vld [vmem:[%s1 + $0x10c] sm:$0xff]
    %v166 = vld [vmem:[%s1 + $0x114] sm:$0xf]
    %v167 = vld [vmem:[%s1 + $0x118] sm:$0xff]
    %v168 = vld [vmem:[%s1 + $0x120] sm:$0xff]
    %v169 = vld [vmem:[%s1 + $0x128] sm:$0xf]
    %v170 = vld [vmem:[%s1 + $0x12c] sm:$0xff]
    %v171 = vld [vmem:[%s1 + $0x134] sm:$0xff]
    %v172 = vld [vmem:[%s1 + $0x13c] sm:$0xf]
    %v173 = vld [vmem:[%s1 + $0x140] sm:$0xff]
    %v174 = vld [vmem:[%s1 + $0x148] sm:$0xff]
    %v175 = vld [vmem:[%s1 + $0x150] sm:$0xf]
    %v176 = vld [vmem:[%s1 + $0x154] sm:$0xff]
    %v177 = vld [vmem:[%s1 + $0x15c] sm:$0xff]
    %v178 = vld [vmem:[%s1 + $0x164] sm:$0xf]
    %v179 = vld [vmem:[%s1 + $0x168] sm:$0xff]
    %v180 = vld [vmem:[%s1 + $0x170] sm:$0xff]
    %v181 = vld [vmem:[%s1 + $0x178] sm:$0xf]
    %v182 = vld [vmem:[%s1 + $0x17c] sm:$0xff]
    %v183 = vld [vmem:[%s1 + $0x184] sm:$0xff]
    %v184 = vld [vmem:[%s1 + $0x18c] sm:$0xf]
    %v185 = vpack.c.bf16 %v109, %v109
    %v186 = vpack.c.bf16 %v124, %v124
    %v187 = vld [vmem:[%s4 + $0x2] sm:$0x1f]
    %v189 = vperm.slane %v187, 0
    %v190 = vperm.slane %v187, 1
    %v191 = vperm.slane %v187, 2
    %v192 = vperm.slane %v187, 3
    %v193 = vperm.slane %v187, 4
    %v259 = vunpack.c.l.b16 %v125
    %v260 = vunpack.c.h.b16 %v125
    %v261 = vunpack.c.l.b16 %v126
    %v262 = vunpack.c.h.b16 %v126
    %v263 = vunpack.c.l.b16 %v127
    %v264 = vunpack.c.l.b16 %v128
    %v265 = vunpack.c.h.b16 %v128
    %v266 = vunpack.c.l.b16 %v129
    %v267 = vunpack.c.h.b16 %v129
    %v268 = vunpack.c.l.b16 %v130
    %v269 = vunpack.c.l.b16 %v131
    %v270 = vunpack.c.h.b16 %v131
    %v271 = vunpack.c.l.b16 %v132
    %v272 = vunpack.c.h.b16 %v132
    %v273 = vunpack.c.l.b16 %v133
    %v274 = vunpack.c.l.b16 %v134
    %v275 = vunpack.c.h.b16 %v134
    %v276 = vunpack.c.l.b16 %v135
    %v277 = vunpack.c.h.b16 %v135
    %v278 = vunpack.c.l.b16 %v136
    %v279 = vunpack.c.l.b16 %v137
    %v280 = vunpack.c.h.b16 %v137
    %v281 = vunpack.c.l.b16 %v138
    %v282 = vunpack.c.h.b16 %v138
    %v283 = vunpack.c.l.b16 %v139
    %v284 = vunpack.c.l.b16 %v140
    %v285 = vunpack.c.h.b16 %v140
    %v286 = vunpack.c.l.b16 %v141
    %v287 = vunpack.c.h.b16 %v141
    %v288 = vunpack.c.l.b16 %v142
    %v289 = vunpack.c.l.b16 %v143
    %v290 = vunpack.c.h.b16 %v143
    %v291 = vunpack.c.l.b16 %v144
    %v292 = vunpack.c.h.b16 %v144
    %v293 = vunpack.c.l.b16 %v145
    %v294 = vunpack.c.l.b16 %v146
    %v295 = vunpack.c.h.b16 %v146
    %v296 = vunpack.c.l.b16 %v147
    %v297 = vunpack.c.h.b16 %v147
    %v298 = vunpack.c.l.b16 %v148
    %v299 = vunpack.c.l.b16 %v149
    %v300 = vunpack.c.h.b16 %v149
    %v301 = vunpack.c.l.b16 %v150
    %v302 = vunpack.c.h.b16 %v150
    %v303 = vunpack.c.l.b16 %v151
    %v304 = vunpack.c.l.b16 %v152
    %v305 = vunpack.c.h.b16 %v152
    %v306 = vunpack.c.l.b16 %v153
    %v307 = vunpack.c.h.b16 %v153
    %v308 = vunpack.c.l.b16 %v154
    %v309 = vunpack.c.l.b16 %v155
    %v310 = vunpack.c.h.b16 %v155
    %v311 = vunpack.c.l.b16 %v156
    %v312 = vunpack.c.h.b16 %v156
    %v313 = vunpack.c.l.b16 %v157
    %v314 = vunpack.c.l.b16 %v158
    %v315 = vunpack.c.h.b16 %v158
    %v316 = vunpack.c.l.b16 %v159
    %v317 = vunpack.c.h.b16 %v159
    %v318 = vunpack.c.l.b16 %v160
    %v319 = vunpack.c.l.b16 %v161
    %v320 = vunpack.c.h.b16 %v161
    %v321 = vunpack.c.l.b16 %v162
    %v322 = vunpack.c.h.b16 %v162
    %v323 = vunpack.c.l.b16 %v163
    %v324 = vunpack.c.l.b16 %v164
    %v325 = vunpack.c.h.b16 %v164
    %v326 = vunpack.c.l.b16 %v165
    %v327 = vunpack.c.h.b16 %v165
    %v328 = vunpack.c.l.b16 %v166
    %v329 = vunpack.c.l.b16 %v167
    %v330 = vunpack.c.h.b16 %v167
    %v331 = vunpack.c.l.b16 %v168
    %v332 = vunpack.c.h.b16 %v168
    %v333 = vunpack.c.l.b16 %v169
    %v334 = vunpack.c.l.b16 %v170
    %v335 = vunpack.c.h.b16 %v170
    %v336 = vunpack.c.l.b16 %v171
    %v337 = vunpack.c.h.b16 %v171
    %v338 = vunpack.c.l.b16 %v172
    %v339 = vunpack.c.l.b16 %v173
    %v340 = vunpack.c.h.b16 %v173
    %v341 = vunpack.c.l.b16 %v174
    %v342 = vunpack.c.h.b16 %v174
    %v343 = vunpack.c.l.b16 %v175
    %v344 = vunpack.c.l.b16 %v176
    %v345 = vunpack.c.h.b16 %v176
    %v346 = vunpack.c.l.b16 %v177
    %v347 = vunpack.c.h.b16 %v177
    %v348 = vunpack.c.l.b16 %v178
    %v349 = vunpack.c.l.b16 %v179
    %v350 = vunpack.c.h.b16 %v179
    %v351 = vunpack.c.l.b16 %v180
    %v352 = vunpack.c.h.b16 %v180
    %v353 = vunpack.c.l.b16 %v181
    %v354 = vunpack.c.l.b16 %v182
    %v355 = vunpack.c.h.b16 %v182
    %v356 = vunpack.c.l.b16 %v183
    %v357 = vunpack.c.h.b16 %v183
    %v358 = vunpack.c.l.b16 %v184
    %v359 = vpack.c.b16 %v264, %v259
    %v360 = vpack.c.b16 %v265, %v260
    %v361 = vpack.c.b16 %v266, %v261
    %v362 = vpack.c.b16 %v267, %v262
    %v363 = vpack.c.b16 %v268, %v263
    %v364 = vpack.c.b16 %v274, %v269
    %v365 = vpack.c.b16 %v275, %v270
    %v366 = vpack.c.b16 %v276, %v271
    %v367 = vpack.c.b16 %v277, %v272
    %v368 = vpack.c.b16 %v278, %v273
    %v369 = vpack.c.b16 %v284, %v279
    %v370 = vpack.c.b16 %v285, %v280
    %v371 = vpack.c.b16 %v286, %v281
    %v372 = vpack.c.b16 %v287, %v282
    %v373 = vpack.c.b16 %v288, %v283
    %v374 = vpack.c.b16 %v294, %v289
    %v375 = vpack.c.b16 %v295, %v290
    %v376 = vpack.c.b16 %v296, %v291
    %v377 = vpack.c.b16 %v297, %v292
    %v378 = vpack.c.b16 %v298, %v293
    %v379 = vpack.c.b16 %v304, %v299
    %v380 = vpack.c.b16 %v305, %v300
    %v381 = vpack.c.b16 %v306, %v301
    %v382 = vpack.c.b16 %v307, %v302
    %v383 = vpack.c.b16 %v308, %v303
    %v384 = vpack.c.b16 %v314, %v309
    %v385 = vpack.c.b16 %v315, %v310
    %v386 = vpack.c.b16 %v316, %v311
    %v387 = vpack.c.b16 %v317, %v312
    %v388 = vpack.c.b16 %v318, %v313
    %v389 = vpack.c.b16 %v324, %v319
    %v390 = vpack.c.b16 %v325, %v320
    %v391 = vpack.c.b16 %v326, %v321
    %v392 = vpack.c.b16 %v327, %v322
    %v393 = vpack.c.b16 %v328, %v323
    %v394 = vpack.c.b16 %v334, %v329
    %v395 = vpack.c.b16 %v335, %v330
    %v396 = vpack.c.b16 %v336, %v331
    %v397 = vpack.c.b16 %v337, %v332
    %v398 = vpack.c.b16 %v338, %v333
    %v399 = vpack.c.b16 %v344, %v339
    %v400 = vpack.c.b16 %v345, %v340
    %v401 = vpack.c.b16 %v346, %v341
    %v402 = vpack.c.b16 %v347, %v342
    %v403 = vpack.c.b16 %v348, %v343
    %v404 = vpack.c.b16 %v354, %v349
    %v405 = vpack.c.b16 %v355, %v350
    %v406 = vpack.c.b16 %v356, %v351
    %v407 = vpack.c.b16 %v357, %v352
    %v408 = vpack.c.b16 %v358, %v353
    %vm459 = vcmask 261120
    %v461 = vsel %vm459, %v186, 0
    %463 = vmatpush.bf16.msra.mxu0 %v394
    %464 = vmatpush.bf16.msra.mxu0 %v389
    %465 = vmatpush.bf16.msra.mxu0 %v384
    %466 = vmatpush.bf16.msra.mxu0 %v379
    %467 = vmatpush.bf16.msra.mxu0 %v374
    %468 = vmatpush.bf16.msra.mxu0 %v369
    %469 = vmatpush.bf16.msra.mxu0 %v364
    %470 = vmatpush.bf16.msra.mxu0 %v359
    %471 = vmatmul.bf16.gmra.mxu0 %v185
    %v472 = vpop.f32.mrf.mxu0
    %v473 = vadd.f32 %v189, %v472
    %v474 = vpop.f32.mrf.mxu0
    %475 = vdwg.mxu0
    %476 = vmatpush.bf16.msra.mxu0 0
    %477 = vmatpush.bf16.msra.mxu0 0
    %478 = vmatpush.bf16.msra.mxu0 0
    %479 = vmatpush.bf16.msra.mxu0 0
    %480 = vmatpush.bf16.msra.mxu0 0
    %481 = vmatpush.bf16.msra.mxu0 0
    %482 = vmatpush.bf16.msra.mxu0 %v404
    %483 = vmatpush.bf16.msra.mxu0 %v399
    %484 = vmatmul.bf16.gmra.mxu0 %v461
    %v485 = vpop.f32.mrf.mxu0
    %v486 = vadd.f32 %v473, %v485
    %v487 = vpop.f32.mrf.mxu0
    %488 = vdwg.mxu0
    %489 = vmatpush.bf16.msra.mxu0 %v395
    %490 = vmatpush.bf16.msra.mxu0 %v390
    %491 = vmatpush.bf16.msra.mxu0 %v385
    %492 = vmatpush.bf16.msra.mxu0 %v380
    %493 = vmatpush.bf16.msra.mxu0 %v375
    %494 = vmatpush.bf16.msra.mxu0 %v370
    %495 = vmatpush.bf16.msra.mxu0 %v365
    %496 = vmatpush.bf16.msra.mxu0 %v360
    %497 = vmatmul.bf16.gmra.mxu0 %v185
    %v498 = vpop.f32.mrf.mxu0
    %v499 = vadd.f32 %v190, %v498
    %v500 = vpop.f32.mrf.mxu0
    %501 = vdwg.mxu0
    %502 = vmatpush.bf16.msra.mxu0 0
    %503 = vmatpush.bf16.msra.mxu0 0
    %504 = vmatpush.bf16.msra.mxu0 0
    %505 = vmatpush.bf16.msra.mxu0 0
    %506 = vmatpush.bf16.msra.mxu0 0
    %507 = vmatpush.bf16.msra.mxu0 0
    %508 = vmatpush.bf16.msra.mxu0 %v405
    %509 = vmatpush.bf16.msra.mxu0 %v400
    %510 = vmatmul.bf16.gmra.mxu0 %v461
    %v511 = vpop.f32.mrf.mxu0
    %v512 = vadd.f32 %v499, %v511
    %v513 = vpop.f32.mrf.mxu0
    %514 = vdwg.mxu0
    %515 = vmatpush.bf16.msra.mxu0 %v396
    %516 = vmatpush.bf16.msra.mxu0 %v391
    %517 = vmatpush.bf16.msra.mxu0 %v386
    %518 = vmatpush.bf16.msra.mxu0 %v381
    %519 = vmatpush.bf16.msra.mxu0 %v376
    %520 = vmatpush.bf16.msra.mxu0 %v371
    %521 = vmatpush.bf16.msra.mxu0 %v366
    %522 = vmatpush.bf16.msra.mxu0 %v361
    %523 = vmatmul.bf16.gmra.mxu0 %v185
    %v524 = vpop.f32.mrf.mxu0
    %v525 = vadd.f32 %v191, %v524
    %v526 = vpop.f32.mrf.mxu0
    %527 = vdwg.mxu0
    %528 = vmatpush.bf16.msra.mxu0 0
    %529 = vmatpush.bf16.msra.mxu0 0
    %530 = vmatpush.bf16.msra.mxu0 0
    %531 = vmatpush.bf16.msra.mxu0 0
    %532 = vmatpush.bf16.msra.mxu0 0
    %533 = vmatpush.bf16.msra.mxu0 0
    %534 = vmatpush.bf16.msra.mxu0 %v406
    %535 = vmatpush.bf16.msra.mxu0 %v401
    %536 = vmatmul.bf16.gmra.mxu0 %v461
    %v537 = vpop.f32.mrf.mxu0
    %v538 = vadd.f32 %v525, %v537
    %v539 = vpop.f32.mrf.mxu0
    %540 = vdwg.mxu0
    %541 = vmatpush.bf16.msra.mxu0 %v397
    %542 = vmatpush.bf16.msra.mxu0 %v392
    %543 = vmatpush.bf16.msra.mxu0 %v387
    %544 = vmatpush.bf16.msra.mxu0 %v382
    %545 = vmatpush.bf16.msra.mxu0 %v377
    %546 = vmatpush.bf16.msra.mxu0 %v372
    %547 = vmatpush.bf16.msra.mxu0 %v367
    %548 = vmatpush.bf16.msra.mxu0 %v362
    %549 = vmatmul.bf16.gmra.mxu0 %v185
    %v550 = vpop.f32.mrf.mxu0
    %v551 = vadd.f32 %v192, %v550
    %v552 = vpop.f32.mrf.mxu0
    %553 = vdwg.mxu0
    %554 = vmatpush.bf16.msra.mxu0 0
    %555 = vmatpush.bf16.msra.mxu0 0
    %556 = vmatpush.bf16.msra.mxu0 0
    %557 = vmatpush.bf16.msra.mxu0 0
    %558 = vmatpush.bf16.msra.mxu0 0
    %559 = vmatpush.bf16.msra.mxu0 0
    %560 = vmatpush.bf16.msra.mxu0 %v407
    %561 = vmatpush.bf16.msra.mxu0 %v402
    %562 = vmatmul.bf16.gmra.mxu0 %v461
    %v563 = vpop.f32.mrf.mxu0
    %v564 = vadd.f32 %v551, %v563
    %v565 = vpop.f32.mrf.mxu0
    %566 = vdwg.mxu0
    %567 = vmatpush.bf16.msra.mxu0 %v398
    %568 = vmatpush.bf16.msra.mxu0 %v393
    %569 = vmatpush.bf16.msra.mxu0 %v388
    %570 = vmatpush.bf16.msra.mxu0 %v383
    %571 = vmatpush.bf16.msra.mxu0 %v378
    %572 = vmatpush.bf16.msra.mxu0 %v373
    %573 = vmatpush.bf16.msra.mxu0 %v368
    %574 = vmatpush.bf16.msra.mxu0 %v363
    %575 = vmatmul.bf16.gmra.mxu0 %v185
    %v576 = vpop.f32.mrf.mxu0
    %v577 = vadd.f32 %v193, %v576
    %v578 = vpop.f32.mrf.mxu0
    %579 = vdwg.mxu0
    %580 = vmatpush.bf16.msra.mxu0 0
    %581 = vmatpush.bf16.msra.mxu0 0
    %582 = vmatpush.bf16.msra.mxu0 0
    %583 = vmatpush.bf16.msra.mxu0 0
    %584 = vmatpush.bf16.msra.mxu0 0
    %585 = vmatpush.bf16.msra.mxu0 0
    %586 = vmatpush.bf16.msra.mxu0 %v408
    %587 = vmatpush.bf16.msra.mxu0 %v403
    %588 = vmatmul.bf16.gmra.mxu0 %v461
    %v589 = vpop.f32.mrf.mxu0
    %v590 = vadd.f32 %v577, %v589
    %v591 = vpop.f32.mrf.mxu0
    %592 = vdwg.mxu0
    %v593 = vxor.u32 %v486, 2147483648
    %v594 = vxor.u32 %v512, 2147483648
    %v595 = vxor.u32 %v538, 2147483648
    %v596 = vxor.u32 %v564, 2147483648
    %v597 = vxor.u32 %v590, 2147483648
    %v598 = vmul.f32 %v593, 1.442695
    %v599 = vpow.pop %v598
    %v600 = vmul.f32 %v594, 1.442695
    %v601 = vpow.pop %v600
    %v602 = vmul.f32 %v595, 1.442695
    %v603 = vpow.pop %v602
    %v604 = vmul.f32 %v596, 1.442695
    %v605 = vpow.pop %v604
    %v606 = vmul.f32 %v597, 1.442695
    %v607 = vpow.pop %v606
    %v608 = vadd.f32 %v599, 1.0
    %v609 = vadd.f32 %v601, 1.0
    %v610 = vadd.f32 %v603, 1.0
    %v611 = vadd.f32 %v605, 1.0
    %v612 = vadd.f32 %v607, 1.0
    %v613 = vrcp.pop %v608
    %v614 = vmul.f32 %v608, %v613
    %v615 = vsub.f32 1.0, %v614
    %v616 = vmul.f32 %v613, %v615
    %v617 = vadd.f32 %v613, %v616
    %vm618 = vweird.f32 %v608
    %vm619 = vweird.f32 %v613
    %vm620 = vmor %vm618, %vm619
    %v621 = vsel %vm620, %v613, %v617
    %v622 = vand.u32 2147483647, %v608
    %vm623 = vcmp.eq.f32.partialorder %v622, 8.507059e+37
    %v624 = vand.u32 %v608, 2147483648
    %v625 = vor.u32 1.1754944e-38, %v624
    %v626 = vsel %vm623, %v625, %v621
    %v627 = vmul.f32 1.0, %v626
    %v628 = vrcp.pop %v609
    %v629 = vmul.f32 %v609, %v628
    %v630 = vsub.f32 1.0, %v629
    %v631 = vmul.f32 %v628, %v630
    %v632 = vadd.f32 %v628, %v631
    %vm633 = vweird.f32 %v609
    %vm634 = vweird.f32 %v628
    %vm635 = vmor %vm633, %vm634
    %v636 = vsel %vm635, %v628, %v632
    %v637 = vand.u32 2147483647, %v609
    %vm638 = vcmp.eq.f32.partialorder %v637, 8.507059e+37
    %v639 = vand.u32 %v609, 2147483648
    %v640 = vor.u32 1.1754944e-38, %v639
    %v641 = vsel %vm638, %v640, %v636
    %v642 = vmul.f32 1.0, %v641
    %v643 = vrcp.pop %v610
    %v644 = vmul.f32 %v610, %v643
    %v645 = vsub.f32 1.0, %v644
    %v646 = vmul.f32 %v643, %v645
    %v647 = vadd.f32 %v643, %v646
    %vm648 = vweird.f32 %v610
    %vm649 = vweird.f32 %v643
    %vm650 = vmor %vm648, %vm649
    %v651 = vsel %vm650, %v643, %v647
    %v652 = vand.u32 2147483647, %v610
    %vm653 = vcmp.eq.f32.partialorder %v652, 8.507059e+37
    %v654 = vand.u32 %v610, 2147483648
    %v655 = vor.u32 1.1754944e-38, %v654
    %v656 = vsel %vm653, %v655, %v651
    %v657 = vmul.f32 1.0, %v656
    %v658 = vrcp.pop %v611
    %v659 = vmul.f32 %v611, %v658
    %v660 = vsub.f32 1.0, %v659
    %v661 = vmul.f32 %v658, %v660
    %v662 = vadd.f32 %v658, %v661
    %vm663 = vweird.f32 %v611
    %vm664 = vweird.f32 %v658
    %vm665 = vmor %vm663, %vm664
    %v666 = vsel %vm665, %v658, %v662
    %v667 = vand.u32 2147483647, %v611
    %vm668 = vcmp.eq.f32.partialorder %v667, 8.507059e+37
    %v669 = vand.u32 %v611, 2147483648
    %v670 = vor.u32 1.1754944e-38, %v669
    %v671 = vsel %vm668, %v670, %v666
    %v672 = vmul.f32 1.0, %v671
    %v673 = vrcp.pop %v612
    %v674 = vmul.f32 %v612, %v673
    %v675 = vsub.f32 1.0, %v674
    %v676 = vmul.f32 %v673, %v675
    %v677 = vadd.f32 %v673, %v676
    %vm678 = vweird.f32 %v612
    %vm679 = vweird.f32 %v673
    %vm680 = vmor %vm678, %vm679
    %v681 = vsel %vm680, %v673, %v677
    %v682 = vand.u32 2147483647, %v612
    %vm683 = vcmp.eq.f32.partialorder %v682, 8.507059e+37
    %v684 = vand.u32 %v612, 2147483648
    %v685 = vor.u32 1.1754944e-38, %v684
    %v686 = vsel %vm683, %v685, %v681
    %v687 = vmul.f32 1.0, %v686
    %v688 = vld [vmem:[#allocation2] sm:$0xff]
    %v689 = vld [vmem:[#allocation2 + $0x8] sm:$0xf]
    %v690 = vld [vmem:[#allocation2 + $0xc] sm:$0xff]
    %v691 = vld [vmem:[#allocation2 + $0x14] sm:$0xf]
    %v692 = vld [vmem:[#allocation2 + $0x18] sm:$0xff]
    %v693 = vld [vmem:[#allocation2 + $0x20] sm:$0xf]
    %v694 = vld [vmem:[#allocation2 + $0x24] sm:$0xff]
    %v695 = vld [vmem:[#allocation2 + $0x2c] sm:$0xf]
    %v696 = vld [vmem:[#allocation2 + $0x30] sm:$0xff]
    %v697 = vld [vmem:[#allocation2 + $0x38] sm:$0xf]
    %v698 = vld [vmem:[#allocation2 + $0x3c] sm:$0xff]
    %v699 = vld [vmem:[#allocation2 + $0x44] sm:$0xf]
    %v700 = vld [vmem:[#allocation2 + $0x48] sm:$0xff]
    %v701 = vld [vmem:[#allocation2 + $0x50] sm:$0xf]
    %v702 = vld [vmem:[#allocation2 + $0x54] sm:$0xff]
    %v703 = vld [vmem:[#allocation2 + $0x5c] sm:$0xf]
    %v704 = vld [vmem:[#allocation2 + $0x60] sm:$0xff]
    %v705 = vld [vmem:[#allocation2 + $0x68] sm:$0xf]
    %v706 = vld [vmem:[#allocation2 + $0x6c] sm:$0xff]
    %v707 = vld [vmem:[#allocation2 + $0x74] sm:$0xf]
    %v708 = vld [vmem:[#allocation2 + $0x78] sm:$0xff]
    %v709 = vld [vmem:[#allocation2 + $0x80] sm:$0xf]
    %v710 = vld [vmem:[#allocation2 + $0x84] sm:$0xff]
    %v711 = vld [vmem:[#allocation2 + $0x8c] sm:$0xf]
    %v712 = vld [vmem:[#allocation2 + $0x90] sm:$0xff]
    %v713 = vld [vmem:[#allocation2 + $0x98] sm:$0xf]
    %v714 = vld [vmem:[#allocation2 + $0x9c] sm:$0xff]
    %v715 = vld [vmem:[#allocation2 + $0xa4] sm:$0xf]
    %v716 = vld [vmem:[#allocation2 + $0xa8] sm:$0xff]
    %v717 = vld [vmem:[#allocation2 + $0xb0] sm:$0xf]
    %v718 = vld [vmem:[#allocation2 + $0xb4] sm:$0xff]
    %v719 = vld [vmem:[#allocation2 + $0xbc] sm:$0xf]
    %v720 = vld [vmem:[#allocation2 + $0xc0] sm:$0xff]
    %v721 = vld [vmem:[#allocation2 + $0xc8] sm:$0xf]
    %v722 = vld [vmem:[#allocation2 + $0xcc] sm:$0xff]
    %v723 = vld [vmem:[#allocation2 + $0xd4] sm:$0xf]
    %v724 = vld [vmem:[#allocation2 + $0xd8] sm:$0xff]
    %v725 = vld [vmem:[#allocation2 + $0xe0] sm:$0xf]
    %v726 = vld [vmem:[#allocation2 + $0xe4] sm:$0xff]
    %v727 = vld [vmem:[#allocation2 + $0xec] sm:$0xf]
    %v728 = vld [vmem:[#allocation2 + $0xf0] sm:$0xff]
    %v729 = vld [vmem:[#allocation2 + $0xf8] sm:$0xf]
    %v730 = vld [vmem:[#allocation2 + $0xfc] sm:$0xff]
    %v731 = vld [vmem:[#allocation2 + $0x104] sm:$0xf]
    %v732 = vld [vmem:[#allocation2 + $0x108] sm:$0xff]
    %v733 = vld [vmem:[#allocation2 + $0x110] sm:$0xf]
    %v734 = vld [vmem:[#allocation2 + $0x114] sm:$0xff]
    %v735 = vld [vmem:[#allocation2 + $0x11c] sm:$0xf]
    %v736 = vld [vmem:[#allocation2 + $0x120] sm:$0xff]
    %v737 = vld [vmem:[#allocation2 + $0x128] sm:$0xf]
    %v738 = vld [vmem:[#allocation2 + $0x12c] sm:$0xff]
    %v739 = vld [vmem:[#allocation2 + $0x134] sm:$0xf]
    %v740 = vld [vmem:[#allocation2 + $0x138] sm:$0xff]
    %v741 = vld [vmem:[#allocation2 + $0x140] sm:$0xf]
    %v742 = vld [vmem:[#allocation2 + $0x144] sm:$0xff]
    %v743 = vld [vmem:[#allocation2 + $0x14c] sm:$0xf]
    %v744 = vld [vmem:[#allocation2 + $0x150] sm:$0xff]
    %v745 = vld [vmem:[#allocation2 + $0x158] sm:$0xf]
    %v746 = vld [vmem:[#allocation2 + $0x15c] sm:$0xff]
    %v747 = vld [vmem:[#allocation2 + $0x164] sm:$0xf]
    %v748 = vld [vmem:[#allocation2 + $0x168] sm:$0xff]
    %v749 = vld [vmem:[#allocation2 + $0x170] sm:$0xf]
    %v750 = vld [vmem:[#allocation2 + $0x174] sm:$0xff]
    %v751 = vld [vmem:[#allocation2 + $0x17c] sm:$0xf]
    %v752 = vld [vmem:[#allocation2 + $0x180] sm:$0xff]
    %v753 = vld [vmem:[#allocation2 + $0x188] sm:$0xf]
    %v754 = vld [vmem:[#allocation2 + $0x18c] sm:$0xff]
    %v755 = vld [vmem:[#allocation2 + $0x194] sm:$0xf]
    %v756 = vld [vmem:[#allocation2 + $0x198] sm:$0xff]
    %v757 = vld [vmem:[#allocation2 + $0x1a0] sm:$0xf]
    %v758 = vld [vmem:[#allocation2 + $0x1a4] sm:$0xff]
    %v759 = vld [vmem:[#allocation2 + $0x1ac] sm:$0xf]
    %v760 = vld [vmem:[#allocation2 + $0x1b0] sm:$0xff]
    %v761 = vld [vmem:[#allocation2 + $0x1b8] sm:$0xf]
    %v762 = vld [vmem:[#allocation2 + $0x1bc] sm:$0xff]
    %v763 = vld [vmem:[#allocation2 + $0x1c4] sm:$0xf]
    %v764 = vld [vmem:[#allocation2 + $0x1c8] sm:$0xff]
    %v765 = vld [vmem:[#allocation2 + $0x1d0] sm:$0xf]
    %v766 = vld [vmem:[#allocation2 + $0x1d4] sm:$0xff]
    %v767 = vld [vmem:[#allocation2 + $0x1dc] sm:$0xf]
    %v768 = vld [vmem:[#allocation2 + $0x1e0] sm:$0xff]
    %v769 = vld [vmem:[#allocation2 + $0x1e8] sm:$0xf]
    %v770 = vld [vmem:[#allocation2 + $0x1ec] sm:$0xff]
    %v771 = vld [vmem:[#allocation2 + $0x1f4] sm:$0xf]
    %v772 = vld [vmem:[#allocation2 + $0x1f8] sm:$0xff]
    %v773 = vld [vmem:[#allocation2 + $0x200] sm:$0xf]
    %v774 = vld [vmem:[#allocation2 + $0x204] sm:$0xff]
    %v775 = vld [vmem:[#allocation2 + $0x20c] sm:$0xf]
    %v776 = vld [vmem:[#allocation2 + $0x210] sm:$0xff]
    %v777 = vld [vmem:[#allocation2 + $0x218] sm:$0xf]
    %v778 = vld [vmem:[#allocation2 + $0x21c] sm:$0xff]
    %v779 = vld [vmem:[#allocation2 + $0x224] sm:$0xf]
    %v780 = vld [vmem:[#allocation2 + $0x228] sm:$0xff]
    %v781 = vld [vmem:[#allocation2 + $0x230] sm:$0xf]
    %v782 = vld [vmem:[#allocation2 + $0x234] sm:$0xff]
    %v783 = vld [vmem:[#allocation2 + $0x23c] sm:$0xf]
    %v784 = vld [vmem:[#allocation2 + $0x240] sm:$0xff]
    %v785 = vld [vmem:[#allocation2 + $0x248] sm:$0xf]
    %v786 = vld [vmem:[#allocation2 + $0x24c] sm:$0xff]
    %v787 = vld [vmem:[#allocation2 + $0x254] sm:$0xf]
    %v788 = vld [vmem:[#allocation2 + $0x258] sm:$0xff]
    %v789 = vld [vmem:[#allocation2 + $0x260] sm:$0xf]
    %v790 = vld [vmem:[#allocation2 + $0x264] sm:$0xff]
    %v791 = vld [vmem:[#allocation2 + $0x26c] sm:$0xf]
    %v792 = vld [vmem:[#allocation2 + $0x270] sm:$0xff]
    %v793 = vld [vmem:[#allocation2 + $0x278] sm:$0xf]
    %v794 = vld [vmem:[#allocation2 + $0x27c] sm:$0xff]
    %v795 = vld [vmem:[#allocation2 + $0x284] sm:$0xf]
    %v796 = vld [vmem:[#allocation2 + $0x288] sm:$0xff]
    %v797 = vld [vmem:[#allocation2 + $0x290] sm:$0xf]
    %v798 = vld [vmem:[#allocation2 + $0x294] sm:$0xff]
    %v799 = vld [vmem:[#allocation2 + $0x29c] sm:$0xf]
    %v800 = vld [vmem:[#allocation2 + $0x2a0] sm:$0xff]
    %v801 = vld [vmem:[#allocation2 + $0x2a8] sm:$0xf]
    %v802 = vld [vmem:[#allocation2 + $0x2ac] sm:$0xff]
    %v803 = vld [vmem:[#allocation2 + $0x2b4] sm:$0xf]
    %v804 = vld [vmem:[#allocation2 + $0x2b8] sm:$0xff]
    %v805 = vld [vmem:[#allocation2 + $0x2c0] sm:$0xf]
    %v806 = vld [vmem:[#allocation2 + $0x2c4] sm:$0xff]
    %v807 = vld [vmem:[#allocation2 + $0x2cc] sm:$0xf]
    %v808 = vld [vmem:[#allocation2 + $0x2d0] sm:$0xff]
    %v809 = vld [vmem:[#allocation2 + $0x2d8] sm:$0xf]
    %v810 = vld [vmem:[#allocation2 + $0x2dc] sm:$0xff]
    %v811 = vld [vmem:[#allocation2 + $0x2e4] sm:$0xf]
    %v812 = vld [vmem:[#allocation2 + $0x2e8] sm:$0xff]
    %v813 = vld [vmem:[#allocation2 + $0x2f0] sm:$0xf]
    %v814 = vld [vmem:[#allocation2 + $0x2f4] sm:$0xff]
    %v815 = vld [vmem:[#allocation2 + $0x2fc] sm:$0xf]
    %v816 = vld [vmem:[#allocation2 + $0x300] sm:$0xff]
    %v817 = vld [vmem:[#allocation2 + $0x308] sm:$0xf]
    %v818 = vld [vmem:[#allocation2 + $0x30c] sm:$0xff]
    %v819 = vld [vmem:[#allocation2 + $0x314] sm:$0xf]
    %v820 = vld [vmem:[#allocation2 + $0x318] sm:$0xff]
    %v821 = vld [vmem:[#allocation2 + $0x320] sm:$0xf]
    %v822 = vld [vmem:[#allocation2 + $0x324] sm:$0xff]
    %v823 = vld [vmem:[#allocation2 + $0x32c] sm:$0xf]
    %v824 = vld [vmem:[#allocation2 + $0x330] sm:$0xff]
    %v825 = vld [vmem:[#allocation2 + $0x338] sm:$0xf]
    %v826 = vld [vmem:[#allocation2 + $0x33c] sm:$0xff]
    %v827 = vld [vmem:[#allocation2 + $0x344] sm:$0xf]
    %v828 = vld [vmem:[#allocation2 + $0x348] sm:$0xff]
    %v829 = vld [vmem:[#allocation2 + $0x350] sm:$0xf]
    %v830 = vld [vmem:[#allocation2 + $0x354] sm:$0xff]
    %v831 = vld [vmem:[#allocation2 + $0x35c] sm:$0xf]
    %v832 = vpack.c.bf16 %v627, %v627
    %v833 = vpack.c.bf16 %v642, %v642
    %v834 = vpack.c.bf16 %v657, %v657
    %v835 = vpack.c.bf16 %v672, %v672
    %v836 = vpack.c.bf16 %v687, %v687
    %v837 = vld [vmem:[%s4 + $0x7] sm:$0x7]
    %v839 = vperm.slane %v837, 0
    %v840 = vperm.slane %v837, 1
    %v841 = vperm.slane %v837, 2
    %v989 = vunpack.c.l.b16 %v688
    %v990 = vunpack.c.h.b16 %v688
    %v991 = vunpack.c.l.b16 %v689
    %v992 = vunpack.c.l.b16 %v690
    %v993 = vunpack.c.h.b16 %v690
    %v994 = vunpack.c.l.b16 %v691
    %v995 = vunpack.c.l.b16 %v692
    %v996 = vunpack.c.h.b16 %v692
    %v997 = vunpack.c.l.b16 %v693
    %v998 = vunpack.c.l.b16 %v694
    %v999 = vunpack.c.h.b16 %v694
    %v1000 = vunpack.c.l.b16 %v695
    %v1001 = vunpack.c.l.b16 %v696
    %v1002 = vunpack.c.h.b16 %v696
    %v1003 = vunpack.c.l.b16 %v697
    %v1004 = vunpack.c.l.b16 %v698
    %v1005 = vunpack.c.h.b16 %v698
    %v1006 = vunpack.c.l.b16 %v699
    %v1007 = vunpack.c.l.b16 %v700
    %v1008 = vunpack.c.h.b16 %v700
    %v1009 = vunpack.c.l.b16 %v701
    %v1010 = vunpack.c.l.b16 %v702
    %v1011 = vunpack.c.h.b16 %v702
    %v1012 = vunpack.c.l.b16 %v703
    %v1013 = vunpack.c.l.b16 %v704
    %v1014 = vunpack.c.h.b16 %v704
    %v1015 = vunpack.c.l.b16 %v705
    %v1016 = vunpack.c.l.b16 %v706
    %v1017 = vunpack.c.h.b16 %v706
    %v1018 = vunpack.c.l.b16 %v707
    %v1019 = vunpack.c.l.b16 %v708
    %v1020 = vunpack.c.h.b16 %v708
    %v1021 = vunpack.c.l.b16 %v709
    %v1022 = vunpack.c.l.b16 %v710
    %v1023 = vunpack.c.h.b16 %v710
    %v1024 = vunpack.c.l.b16 %v711
    %v1025 = vunpack.c.l.b16 %v712
    %v1026 = vunpack.c.h.b16 %v712
    %v1027 = vunpack.c.l.b16 %v713
    %v1028 = vunpack.c.l.b16 %v714
    %v1029 = vunpack.c.h.b16 %v714
    %v1030 = vunpack.c.l.b16 %v715
    %v1031 = vunpack.c.l.b16 %v716
    %v1032 = vunpack.c.h.b16 %v716
    %v1033 = vunpack.c.l.b16 %v717
    %v1034 = vunpack.c.l.b16 %v718
    %v1035 = vunpack.c.h.b16 %v718
    %v1036 = vunpack.c.l.b16 %v719
    %v1037 = vunpack.c.l.b16 %v720
    %v1038 = vunpack.c.h.b16 %v720
    %v1039 = vunpack.c.l.b16 %v721
    %v1040 = vunpack.c.l.b16 %v722
    %v1041 = vunpack.c.h.b16 %v722
    %v1042 = vunpack.c.l.b16 %v723
    %v1043 = vunpack.c.l.b16 %v724
    %v1044 = vunpack.c.h.b16 %v724
    %v1045 = vunpack.c.l.b16 %v725
    %v1046 = vunpack.c.l.b16 %v726
    %v1047 = vunpack.c.h.b16 %v726
    %v1048 = vunpack.c.l.b16 %v727
    %v1049 = vunpack.c.l.b16 %v728
    %v1050 = vunpack.c.h.b16 %v728
    %v1051 = vunpack.c.l.b16 %v729
    %v1052 = vunpack.c.l.b16 %v730
    %v1053 = vunpack.c.h.b16 %v730
    %v1054 = vunpack.c.l.b16 %v731
    %v1055 = vunpack.c.l.b16 %v732
    %v1056 = vunpack.c.h.b16 %v732
    %v1057 = vunpack.c.l.b16 %v733
    %v1058 = vunpack.c.l.b16 %v734
    %v1059 = vunpack.c.h.b16 %v734
    %v1060 = vunpack.c.l.b16 %v735
    %v1061 = vunpack.c.l.b16 %v736
    %v1062 = vunpack.c.h.b16 %v736
    %v1063 = vunpack.c.l.b16 %v737
    %v1064 = vunpack.c.l.b16 %v738
    %v1065 = vunpack.c.h.b16 %v738
    %v1066 = vunpack.c.l.b16 %v739
    %v1067 = vunpack.c.l.b16 %v740
    %v1068 = vunpack.c.h.b16 %v740
    %v1069 = vunpack.c.l.b16 %v741
    %v1070 = vunpack.c.l.b16 %v742
    %v1071 = vunpack.c.h.b16 %v742
    %v1072 = vunpack.c.l.b16 %v743
    %v1073 = vunpack.c.l.b16 %v744
    %v1074 = vunpack.c.h.b16 %v744
    %v1075 = vunpack.c.l.b16 %v745
    %v1076 = vunpack.c.l.b16 %v746
    %v1077 = vunpack.c.h.b16 %v746
    %v1078 = vunpack.c.l.b16 %v747
    %v1079 = vunpack.c.l.b16 %v748
    %v1080 = vunpack.c.h.b16 %v748
    %v1081 = vunpack.c.l.b16 %v749
    %v1082 = vunpack.c.l.b16 %v750
    %v1083 = vunpack.c.h.b16 %v750
    %v1084 = vunpack.c.l.b16 %v751
    %v1085 = vunpack.c.l.b16 %v752
    %v1086 = vunpack.c.h.b16 %v752
    %v1087 = vunpack.c.l.b16 %v753
    %v1088 = vunpack.c.l.b16 %v754
    %v1089 = vunpack.c.h.b16 %v754
    %v1090 = vunpack.c.l.b16 %v755
    %v1091 = vunpack.c.l.b16 %v756
    %v1092 = vunpack.c.h.b16 %v756
    %v1093 = vunpack.c.l.b16 %v757
    %v1094 = vunpack.c.l.b16 %v758
    %v1095 = vunpack.c.h.b16 %v758
    %v1096 = vunpack.c.l.b16 %v759
    %v1097 = vunpack.c.l.b16 %v760
    %v1098 = vunpack.c.h.b16 %v760
    %v1099 = vunpack.c.l.b16 %v761
    %v1100 = vunpack.c.l.b16 %v762
    %v1101 = vunpack.c.h.b16 %v762
    %v1102 = vunpack.c.l.b16 %v763
    %v1103 = vunpack.c.l.b16 %v764
    %v1104 = vunpack.c.h.b16 %v764
    %v1105 = vunpack.c.l.b16 %v765
    %v1106 = vunpack.c.l.b16 %v766
    %v1107 = vunpack.c.h.b16 %v766
    %v1108 = vunpack.c.l.b16 %v767
    %v1109 = vunpack.c.l.b16 %v768
    %v1110 = vunpack.c.h.b16 %v768
    %v1111 = vunpack.c.l.b16 %v769
    %v1112 = vunpack.c.l.b16 %v770
    %v1113 = vunpack.c.h.b16 %v770
    %v1114 = vunpack.c.l.b16 %v771
    %v1115 = vunpack.c.l.b16 %v772
    %v1116 = vunpack.c.h.b16 %v772
    %v1117 = vunpack.c.l.b16 %v773
    %v1118 = vunpack.c.l.b16 %v774
    %v1119 = vunpack.c.h.b16 %v774
    %v1120 = vunpack.c.l.b16 %v775
    %v1121 = vunpack.c.l.b16 %v776
    %v1122 = vunpack.c.h.b16 %v776
    %v1123 = vunpack.c.l.b16 %v777
    %v1124 = vunpack.c.l.b16 %v778
    %v1125 = vunpack.c.h.b16 %v778
    %v1126 = vunpack.c.l.b16 %v779
    %v1127 = vunpack.c.l.b16 %v780
    %v1128 = vunpack.c.h.b16 %v780
    %v1129 = vunpack.c.l.b16 %v781
    %v1130 = vunpack.c.l.b16 %v782
    %v1131 = vunpack.c.h.b16 %v782
    %v1132 = vunpack.c.l.b16 %v783
    %v1133 = vunpack.c.l.b16 %v784
    %v1134 = vunpack.c.h.b16 %v784
    %v1135 = vunpack.c.l.b16 %v785
    %v1136 = vunpack.c.l.b16 %v786
    %v1137 = vunpack.c.h.b16 %v786
    %v1138 = vunpack.c.l.b16 %v787
    %v1139 = vunpack.c.l.b16 %v788
    %v1140 = vunpack.c.h.b16 %v788
    %v1141 = vunpack.c.l.b16 %v789
    %v1142 = vunpack.c.l.b16 %v790
    %v1143 = vunpack.c.h.b16 %v790
    %v1144 = vunpack.c.l.b16 %v791
    %v1145 = vunpack.c.l.b16 %v792
    %v1146 = vunpack.c.h.b16 %v792
    %v1147 = vunpack.c.l.b16 %v793
    %v1148 = vunpack.c.l.b16 %v794
    %v1149 = vunpack.c.h.b16 %v794
    %v1150 = vunpack.c.l.b16 %v795
    %v1151 = vunpack.c.l.b16 %v796
    %v1152 = vunpack.c.h.b16 %v796
    %v1153 = vunpack.c.l.b16 %v797
    %v1154 = vunpack.c.l.b16 %v798
    %v1155 = vunpack.c.h.b16 %v798
    %v1156 = vunpack.c.l.b16 %v799
    %v1157 = vunpack.c.l.b16 %v800
    %v1158 = vunpack.c.h.b16 %v800
    %v1159 = vunpack.c.l.b16 %v801
    %v1160 = vunpack.c.l.b16 %v802
    %v1161 = vunpack.c.h.b16 %v802
    %v1162 = vunpack.c.l.b16 %v803
    %v1163 = vunpack.c.l.b16 %v804
    %v1164 = vunpack.c.h.b16 %v804
    %v1165 = vunpack.c.l.b16 %v805
    %v1166 = vunpack.c.l.b16 %v806
    %v1167 = vunpack.c.h.b16 %v806
    %v1168 = vunpack.c.l.b16 %v807
    %v1169 = vunpack.c.l.b16 %v808
    %v1170 = vunpack.c.h.b16 %v808
    %v1171 = vunpack.c.l.b16 %v809
    %v1172 = vunpack.c.l.b16 %v810
    %v1173 = vunpack.c.h.b16 %v810
    %v1174 = vunpack.c.l.b16 %v811
    %v1175 = vunpack.c.l.b16 %v812
    %v1176 = vunpack.c.h.b16 %v812
    %v1177 = vunpack.c.l.b16 %v813
    %v1178 = vunpack.c.l.b16 %v814
    %v1179 = vunpack.c.h.b16 %v814
    %v1180 = vunpack.c.l.b16 %v815
    %v1181 = vunpack.c.l.b16 %v816
    %v1182 = vunpack.c.h.b16 %v816
    %v1183 = vunpack.c.l.b16 %v817
    %v1184 = vunpack.c.l.b16 %v818
    %v1185 = vunpack.c.h.b16 %v818
    %v1186 = vunpack.c.l.b16 %v819
    %v1187 = vunpack.c.l.b16 %v820
    %v1188 = vunpack.c.h.b16 %v820
    %v1189 = vunpack.c.l.b16 %v821
    %v1190 = vunpack.c.l.b16 %v822
    %v1191 = vunpack.c.h.b16 %v822
    %v1192 = vunpack.c.l.b16 %v823
    %v1193 = vunpack.c.l.b16 %v824
    %v1194 = vunpack.c.h.b16 %v824
    %v1195 = vunpack.c.l.b16 %v825
    %v1196 = vunpack.c.l.b16 %v826
    %v1197 = vunpack.c.h.b16 %v826
    %v1198 = vunpack.c.l.b16 %v827
    %v1199 = vunpack.c.l.b16 %v828
    %v1200 = vunpack.c.h.b16 %v828
    %v1201 = vunpack.c.l.b16 %v829
    %v1202 = vunpack.c.l.b16 %v830
    %v1203 = vunpack.c.h.b16 %v830
    %v1204 = vunpack.c.l.b16 %v831
    %v1205 = vpack.c.b16 %v992, %v989
    %v1206 = vpack.c.b16 %v993, %v990
    %v1207 = vpack.c.b16 %v994, %v991
    %v1208 = vpack.c.b16 %v998, %v995
    %v1209 = vpack.c.b16 %v999, %v996
    %v1210 = vpack.c.b16 %v1000, %v997
    %v1211 = vpack.c.b16 %v1004, %v1001
    %v1212 = vpack.c.b16 %v1005, %v1002
    %v1213 = vpack.c.b16 %v1006, %v1003
    %v1214 = vpack.c.b16 %v1010, %v1007
    %v1215 = vpack.c.b16 %v1011, %v1008
    %v1216 = vpack.c.b16 %v1012, %v1009
    %v1217 = vpack.c.b16 %v1016, %v1013
    %v1218 = vpack.c.b16 %v1017, %v1014
    %v1219 = vpack.c.b16 %v1018, %v1015
    %v1220 = vpack.c.b16 %v1022, %v1019
    %v1221 = vpack.c.b16 %v1023, %v1020
    %v1222 = vpack.c.b16 %v1024, %v1021
    %v1223 = vpack.c.b16 %v1028, %v1025
    %v1224 = vpack.c.b16 %v1029, %v1026
    %v1225 = vpack.c.b16 %v1030, %v1027
    %v1226 = vpack.c.b16 %v1034, %v1031
    %v1227 = vpack.c.b16 %v1035, %v1032
    %v1228 = vpack.c.b16 %v1036, %v1033
    %v1229 = vpack.c.b16 %v1040, %v1037
    %v1230 = vpack.c.b16 %v1041, %v1038
    %v1231 = vpack.c.b16 %v1042, %v1039
    %v1232 = vpack.c.b16 %v1046, %v1043
    %v1233 = vpack.c.b16 %v1047, %v1044
    %v1234 = vpack.c.b16 %v1048, %v1045
    %v1235 = vpack.c.b16 %v1052, %v1049
    %v1236 = vpack.c.b16 %v1053, %v1050
    %v1237 = vpack.c.b16 %v1054, %v1051
    %v1238 = vpack.c.b16 %v1058, %v1055
    %v1239 = vpack.c.b16 %v1059, %v1056
    %v1240 = vpack.c.b16 %v1060, %v1057
    %v1241 = vpack.c.b16 %v1064, %v1061
    %v1242 = vpack.c.b16 %v1065, %v1062
    %v1243 = vpack.c.b16 %v1066, %v1063
    %v1244 = vpack.c.b16 %v1070, %v1067
    %v1245 = vpack.c.b16 %v1071, %v1068
    %v1246 = vpack.c.b16 %v1072, %v1069
    %v1247 = vpack.c.b16 %v1076, %v1073
    %v1248 = vpack.c.b16 %v1077, %v1074
    %v1249 = vpack.c.b16 %v1078, %v1075
    %v1250 = vpack.c.b16 %v1082, %v1079
    %v1251 = vpack.c.b16 %v1083, %v1080
    %v1252 = vpack.c.b16 %v1084, %v1081
    %v1253 = vpack.c.b16 %v1088, %v1085
    %v1254 = vpack.c.b16 %v1089, %v1086
    %v1255 = vpack.c.b16 %v1090, %v1087
    %v1256 = vpack.c.b16 %v1094, %v1091
    %v1257 = vpack.c.b16 %v1095, %v1092
    %v1258 = vpack.c.b16 %v1096, %v1093
    %v1259 = vpack.c.b16 %v1100, %v1097
    %v1260 = vpack.c.b16 %v1101, %v1098
    %v1261 = vpack.c.b16 %v1102, %v1099
    %v1262 = vpack.c.b16 %v1106, %v1103
    %v1263 = vpack.c.b16 %v1107, %v1104
    %v1264 = vpack.c.b16 %v1108, %v1105
    %v1265 = vpack.c.b16 %v1112, %v1109
    %v1266 = vpack.c.b16 %v1113, %v1110
    %v1267 = vpack.c.b16 %v1114, %v1111
    %v1268 = vpack.c.b16 %v1118, %v1115
    %v1269 = vpack.c.b16 %v1119, %v1116
    %v1270 = vpack.c.b16 %v1120, %v1117
    %v1271 = vpack.c.b16 %v1124, %v1121
    %v1272 = vpack.c.b16 %v1125, %v1122
    %v1273 = vpack.c.b16 %v1126, %v1123
    %v1274 = vpack.c.b16 %v1130, %v1127
    %v1275 = vpack.c.b16 %v1131, %v1128
    %v1276 = vpack.c.b16 %v1132, %v1129
    %v1277 = vpack.c.b16 %v1136, %v1133
    %v1278 = vpack.c.b16 %v1137, %v1134
    %v1279 = vpack.c.b16 %v1138, %v1135
    %v1280 = vpack.c.b16 %v1142, %v1139
    %v1281 = vpack.c.b16 %v1143, %v1140
    %v1282 = vpack.c.b16 %v1144, %v1141
    %v1283 = vpack.c.b16 %v1148, %v1145
    %v1284 = vpack.c.b16 %v1149, %v1146
    %v1285 = vpack.c.b16 %v1150, %v1147
    %v1286 = vpack.c.b16 %v1154, %v1151
    %v1287 = vpack.c.b16 %v1155, %v1152
    %v1288 = vpack.c.b16 %v1156, %v1153
    %v1289 = vpack.c.b16 %v1160, %v1157
    %v1290 = vpack.c.b16 %v1161, %v1158
    %v1291 = vpack.c.b16 %v1162, %v1159
    %v1292 = vpack.c.b16 %v1166, %v1163
    %v1293 = vpack.c.b16 %v1167, %v1164
    %v1294 = vpack.c.b16 %v1168, %v1165
    %v1295 = vpack.c.b16 %v1172, %v1169
    %v1296 = vpack.c.b16 %v1173, %v1170
    %v1297 = vpack.c.b16 %v1174, %v1171
    %v1298 = vpack.c.b16 %v1178, %v1175
    %v1299 = vpack.c.b16 %v1179, %v1176
    %v1300 = vpack.c.b16 %v1180, %v1177
    %v1301 = vpack.c.b16 %v1184, %v1181
    %v1302 = vpack.c.b16 %v1185, %v1182
    %v1303 = vpack.c.b16 %v1186, %v1183
    %v1304 = vpack.c.b16 %v1190, %v1187
    %v1305 = vpack.c.b16 %v1191, %v1188
    %v1306 = vpack.c.b16 %v1192, %v1189
    %v1307 = vpack.c.b16 %v1196, %v1193
    %v1308 = vpack.c.b16 %v1197, %v1194
    %v1309 = vpack.c.b16 %v1198, %v1195
    %v1310 = vpack.c.b16 %v1202, %v1199
    %v1311 = vpack.c.b16 %v1203, %v1200
    %v1312 = vpack.c.b16 %v1204, %v1201
    %vm1421 = vcmask 523264
    %v1423 = vsel %vm1421, %v836, 0
    %1425 = vmatpush.bf16.msra.mxu0 %v1226
    %1426 = vmatpush.bf16.msra.mxu0 %v1223
    %1427 = vmatpush.bf16.msra.mxu0 %v1220
    %1428 = vmatpush.bf16.msra.mxu0 %v1217
    %1429 = vmatpush.bf16.msra.mxu0 %v1214
    %1430 = vmatpush.bf16.msra.mxu0 %v1211
    %1431 = vmatpush.bf16.msra.mxu0 %v1208
    %1432 = vmatpush.bf16.msra.mxu0 %v1205
    %1433 = vmatmul.bf16.gmra.mxu0 %v832
    %v1434 = vpop.f32.mrf.mxu0
    %v1435 = vadd.f32 %v839, %v1434
    %v1436 = vpop.f32.mrf.mxu0
    %1437 = vdwg.mxu0
    %1438 = vmatpush.bf16.msra.mxu0 %v1250
    %1439 = vmatpush.bf16.msra.mxu0 %v1247
    %1440 = vmatpush.bf16.msra.mxu0 %v1244
    %1441 = vmatpush.bf16.msra.mxu0 %v1241
    %1442 = vmatpush.bf16.msra.mxu0 %v1238
    %1443 = vmatpush.bf16.msra.mxu0 %v1235
    %1444 = vmatpush.bf16.msra.mxu0 %v1232
    %1445 = vmatpush.bf16.msra.mxu0 %v1229
    %1446 = vmatmul.bf16.gmra.mxu0 %v833
    %v1447 = vpop.f32.mrf.mxu0
    %v1448 = vadd.f32 %v1435, %v1447
    %v1449 = vpop.f32.mrf.mxu0
    %1450 = vdwg.mxu0
    %1451 = vmatpush.bf16.msra.mxu0 %v1274
    %1452 = vmatpush.bf16.msra.mxu0 %v1271
    %1453 = vmatpush.bf16.msra.mxu0 %v1268
    %1454 = vmatpush.bf16.msra.mxu0 %v1265
    %1455 = vmatpush.bf16.msra.mxu0 %v1262
    %1456 = vmatpush.bf16.msra.mxu0 %v1259
    %1457 = vmatpush.bf16.msra.mxu0 %v1256
    %1458 = vmatpush.bf16.msra.mxu0 %v1253
    %1459 = vmatmul.bf16.gmra.mxu0 %v834
    %v1460 = vpop.f32.mrf.mxu0
    %v1461 = vadd.f32 %v1448, %v1460
    %v1462 = vpop.f32.mrf.mxu0
    %1463 = vdwg.mxu0
    %1464 = vmatpush.bf16.msra.mxu0 %v1298
    %1465 = vmatpush.bf16.msra.mxu0 %v1295
    %1466 = vmatpush.bf16.msra.mxu0 %v1292
    %1467 = vmatpush.bf16.msra.mxu0 %v1289
    %1468 = vmatpush.bf16.msra.mxu0 %v1286
    %1469 = vmatpush.bf16.msra.mxu0 %v1283
    %1470 = vmatpush.bf16.msra.mxu0 %v1280
    %1471 = vmatpush.bf16.msra.mxu0 %v1277
    %1472 = vmatmul.bf16.gmra.mxu0 %v835
    %v1473 = vpop.f32.mrf.mxu0
    %v1474 = vadd.f32 %v1461, %v1473
    %v1475 = vpop.f32.mrf.mxu0
    %1476 = vdwg.mxu0
    %1477 = vmatpush.bf16.msra.mxu0 0
    %1478 = vmatpush.bf16.msra.mxu0 0
    %1479 = vmatpush.bf16.msra.mxu0 0
    %1480 = vmatpush.bf16.msra.mxu0 0
    %1481 = vmatpush.bf16.msra.mxu0 %v1310
    %1482 = vmatpush.bf16.msra.mxu0 %v1307
    %1483 = vmatpush.bf16.msra.mxu0 %v1304
    %1484 = vmatpush.bf16.msra.mxu0 %v1301
    %1485 = vmatmul.bf16.gmra.mxu0 %v1423
    %v1486 = vpop.f32.mrf.mxu0
    %v1487 = vadd.f32 %v1474, %v1486
    %v1488 = vpop.f32.mrf.mxu0
    %1489 = vdwg.mxu0
    %1490 = vmatpush.bf16.msra.mxu0 %v1227
    %1491 = vmatpush.bf16.msra.mxu0 %v1224
    %1492 = vmatpush.bf16.msra.mxu0 %v1221
    %1493 = vmatpush.bf16.msra.mxu0 %v1218
    %1494 = vmatpush.bf16.msra.mxu0 %v1215
    %1495 = vmatpush.bf16.msra.mxu0 %v1212
    %1496 = vmatpush.bf16.msra.mxu0 %v1209
    %1497 = vmatpush.bf16.msra.mxu0 %v1206
    %1498 = vmatmul.bf16.gmra.mxu0 %v832
    %v1499 = vpop.f32.mrf.mxu0
    %v1500 = vadd.f32 %v840, %v1499
    %v1501 = vpop.f32.mrf.mxu0
    %1502 = vdwg.mxu0
    %1503 = vmatpush.bf16.msra.mxu0 %v1251
    %1504 = vmatpush.bf16.msra.mxu0 %v1248
    %1505 = vmatpush.bf16.msra.mxu0 %v1245
    %1506 = vmatpush.bf16.msra.mxu0 %v1242
    %1507 = vmatpush.bf16.msra.mxu0 %v1239
    %1508 = vmatpush.bf16.msra.mxu0 %v1236
    %1509 = vmatpush.bf16.msra.mxu0 %v1233
    %1510 = vmatpush.bf16.msra.mxu0 %v1230
    %1511 = vmatmul.bf16.gmra.mxu0 %v833
    %v1512 = vpop.f32.mrf.mxu0
    %v1513 = vadd.f32 %v1500, %v1512
    %v1514 = vpop.f32.mrf.mxu0
    %1515 = vdwg.mxu0
    %1516 = vmatpush.bf16.msra.mxu0 %v1275
    %1517 = vmatpush.bf16.msra.mxu0 %v1272
    %1518 = vmatpush.bf16.msra.mxu0 %v1269
    %1519 = vmatpush.bf16.msra.mxu0 %v1266
    %1520 = vmatpush.bf16.msra.mxu0 %v1263
    %1521 = vmatpush.bf16.msra.mxu0 %v1260
    %1522 = vmatpush.bf16.msra.mxu0 %v1257
    %1523 = vmatpush.bf16.msra.mxu0 %v1254
    %1524 = vmatmul.bf16.gmra.mxu0 %v834
    %v1525 = vpop.f32.mrf.mxu0
    %v1526 = vadd.f32 %v1513, %v1525
    %v1527 = vpop.f32.mrf.mxu0
    %1528 = vdwg.mxu0
    %1529 = vmatpush.bf16.msra.mxu0 %v1299
    %1530 = vmatpush.bf16.msra.mxu0 %v1296
    %1531 = vmatpush.bf16.msra.mxu0 %v1293
    %1532 = vmatpush.bf16.msra.mxu0 %v1290
    %1533 = vmatpush.bf16.msra.mxu0 %v1287
    %1534 = vmatpush.bf16.msra.mxu0 %v1284
    %1535 = vmatpush.bf16.msra.mxu0 %v1281
    %1536 = vmatpush.bf16.msra.mxu0 %v1278
    %1537 = vmatmul.bf16.gmra.mxu0 %v835
    %v1538 = vpop.f32.mrf.mxu0
    %v1539 = vadd.f32 %v1526, %v1538
    %v1540 = vpop.f32.mrf.mxu0
    %1541 = vdwg.mxu0
    %1542 = vmatpush.bf16.msra.mxu0 0
    %1543 = vmatpush.bf16.msra.mxu0 0
    %1544 = vmatpush.bf16.msra.mxu0 0
    %1545 = vmatpush.bf16.msra.mxu0 0
    %1546 = vmatpush.bf16.msra.mxu0 %v1311
    %1547 = vmatpush.bf16.msra.mxu0 %v1308
    %1548 = vmatpush.bf16.msra.mxu0 %v1305
    %1549 = vmatpush.bf16.msra.mxu0 %v1302
    %1550 = vmatmul.bf16.gmra.mxu0 %v1423
    %v1551 = vpop.f32.mrf.mxu0
    %v1552 = vadd.f32 %v1539, %v1551
    %v1553 = vpop.f32.mrf.mxu0
    %1554 = vdwg.mxu0
    %1555 = vmatpush.bf16.msra.mxu0 %v1228
    %1556 = vmatpush.bf16.msra.mxu0 %v1225
    %1557 = vmatpush.bf16.msra.mxu0 %v1222
    %1558 = vmatpush.bf16.msra.mxu0 %v1219
    %1559 = vmatpush.bf16.msra.mxu0 %v1216
    %1560 = vmatpush.bf16.msra.mxu0 %v1213
    %1561 = vmatpush.bf16.msra.mxu0 %v1210
    %1562 = vmatpush.bf16.msra.mxu0 %v1207
    %1563 = vmatmul.bf16.gmra.mxu0 %v832
    %v1564 = vpop.f32.mrf.mxu0
    %v1565 = vadd.f32 %v841, %v1564
    %v1566 = vpop.f32.mrf.mxu0
    %1567 = vdwg.mxu0
    %1568 = vmatpush.bf16.msra.mxu0 %v1252
    %1569 = vmatpush.bf16.msra.mxu0 %v1249
    %1570 = vmatpush.bf16.msra.mxu0 %v1246
    %1571 = vmatpush.bf16.msra.mxu0 %v1243
    %1572 = vmatpush.bf16.msra.mxu0 %v1240
    %1573 = vmatpush.bf16.msra.mxu0 %v1237
    %1574 = vmatpush.bf16.msra.mxu0 %v1234
    %1575 = vmatpush.bf16.msra.mxu0 %v1231
    %1576 = vmatmul.bf16.gmra.mxu0 %v833
    %v1577 = vpop.f32.mrf.mxu0
    %v1578 = vadd.f32 %v1565, %v1577
    %v1579 = vpop.f32.mrf.mxu0
    %1580 = vdwg.mxu0
    %1581 = vmatpush.bf16.msra.mxu0 %v1276
    %1582 = vmatpush.bf16.msra.mxu0 %v1273
    %1583 = vmatpush.bf16.msra.mxu0 %v1270
    %1584 = vmatpush.bf16.msra.mxu0 %v1267
    %1585 = vmatpush.bf16.msra.mxu0 %v1264
    %1586 = vmatpush.bf16.msra.mxu0 %v1261
    %1587 = vmatpush.bf16.msra.mxu0 %v1258
    %1588 = vmatpush.bf16.msra.mxu0 %v1255
    %1589 = vmatmul.bf16.gmra.mxu0 %v834
    %v1590 = vpop.f32.mrf.mxu0
    %v1591 = vadd.f32 %v1578, %v1590
    %v1592 = vpop.f32.mrf.mxu0
    %1593 = vdwg.mxu0
    %1594 = vmatpush.bf16.msra.mxu0 %v1300
    %1595 = vmatpush.bf16.msra.mxu0 %v1297
    %1596 = vmatpush.bf16.msra.mxu0 %v1294
    %1597 = vmatpush.bf16.msra.mxu0 %v1291
    %1598 = vmatpush.bf16.msra.mxu0 %v1288
    %1599 = vmatpush.bf16.msra.mxu0 %v1285
    %1600 = vmatpush.bf16.msra.mxu0 %v1282
    %1601 = vmatpush.bf16.msra.mxu0 %v1279
    %1602 = vmatmul.bf16.gmra.mxu0 %v835
    %v1603 = vpop.f32.mrf.mxu0
    %v1604 = vadd.f32 %v1591, %v1603
    %v1605 = vpop.f32.mrf.mxu0
    %1606 = vdwg.mxu0
    %1607 = vmatpush.bf16.msra.mxu0 0
    %1608 = vmatpush.bf16.msra.mxu0 0
    %1609 = vmatpush.bf16.msra.mxu0 0
    %1610 = vmatpush.bf16.msra.mxu0 0
    %1611 = vmatpush.bf16.msra.mxu0 %v1312
    %1612 = vmatpush.bf16.msra.mxu0 %v1309
    %1613 = vmatpush.bf16.msra.mxu0 %v1306
    %1614 = vmatpush.bf16.msra.mxu0 %v1303
    %1615 = vmatmul.bf16.gmra.mxu0 %v1423
    %v1616 = vpop.f32.mrf.mxu0
    %v1617 = vadd.f32 %v1604, %v1616
    %v1618 = vpop.f32.mrf.mxu0
    %1619 = vdwg.mxu0
    %vm1620 = vcmp.ge.f32.partialorder %v1487, 0.0
    %vm1621 = vcmp.ge.f32.partialorder %v1552, 0.0
    %vm1622 = vcmp.ge.f32.partialorder %v1617, 0.0
    %v1623 = vmul.f32 %v1487, 0.2
    %v1624 = vmul.f32 %v1552, 0.2
    %v1625 = vmul.f32 %v1617, 0.2
    %v1626 = vsel %vm1620, %v1487, %v1623
    %v1627 = vsel %vm1621, %v1552, %v1624
    %v1628 = vsel %vm1622, %v1617, %v1625
    %v1629 = vld [vmem:[#allocation2 + $0x360] sm:$0xff]
    %v1630 = vld [vmem:[#allocation2 + $0x368] sm:$0xf]
    %v1631 = vld [vmem:[#allocation2 + $0x36c] sm:$0xff]
    %v1632 = vld [vmem:[#allocation2 + $0x374] sm:$0xf]
    %v1633 = vld [vmem:[#allocation2 + $0x378] sm:$0xff]
    %v1634 = vld [vmem:[#allocation2 + $0x380] sm:$0xf]
    %v1635 = vld [vmem:[#allocation2 + $0x384] sm:$0xff]
    %v1636 = vld [vmem:[#allocation2 + $0x38c] sm:$0xf]
    %v1637 = vld [vmem:[#allocation2 + $0x390] sm:$0xff]
    %v1638 = vld [vmem:[#allocation2 + $0x398] sm:$0xf]
    %v1639 = vld [vmem:[#allocation2 + $0x39c] sm:$0xff]
    %v1640 = vld [vmem:[#allocation2 + $0x3a4] sm:$0xf]
    %v1641 = vld [vmem:[#allocation2 + $0x3a8] sm:$0xff]
    %v1642 = vld [vmem:[#allocation2 + $0x3b0] sm:$0xf]
    %v1643 = vld [vmem:[#allocation2 + $0x3b4] sm:$0xff]
    %v1644 = vld [vmem:[#allocation2 + $0x3bc] sm:$0xf]
    %v1645 = vld [vmem:[#allocation2 + $0x3c0] sm:$0xff]
    %v1646 = vld [vmem:[#allocation2 + $0x3c8] sm:$0xf]
    %v1647 = vld [vmem:[#allocation2 + $0x3cc] sm:$0xff]
    %v1648 = vld [vmem:[#allocation2 + $0x3d4] sm:$0xf]
    %v1649 = vld [vmem:[#allocation2 + $0x3d8] sm:$0xff]
    %v1650 = vld [vmem:[#allocation2 + $0x3e0] sm:$0xf]
    %v1651 = vld [vmem:[#allocation2 + $0x3e4] sm:$0xff]
    %v1652 = vld [vmem:[#allocation2 + $0x3ec] sm:$0xf]
    %v1653 = vld [vmem:[#allocation2 + $0x3f0] sm:$0xff]
    %v1654 = vld [vmem:[#allocation2 + $0x3f8] sm:$0xf]
    %v1655 = vld [vmem:[#allocation2 + $0x3fc] sm:$0xff]
    %v1656 = vld [vmem:[#allocation2 + $0x404] sm:$0xf]
    %v1657 = vld [vmem:[#allocation2 + $0x408] sm:$0xff]
    %v1658 = vld [vmem:[#allocation2 + $0x410] sm:$0xf]
    %v1659 = vld [vmem:[#allocation2 + $0x414] sm:$0xff]
    %v1660 = vld [vmem:[#allocation2 + $0x41c] sm:$0xf]
    %v1661 = vld [vmem:[#allocation2 + $0x420] sm:$0xff]
    %v1662 = vld [vmem:[#allocation2 + $0x428] sm:$0xf]
    %v1663 = vld [vmem:[#allocation2 + $0x42c] sm:$0xff]
    %v1664 = vld [vmem:[#allocation2 + $0x434] sm:$0xf]
    %v1665 = vld [vmem:[#allocation2 + $0x438] sm:$0xff]
    %v1666 = vld [vmem:[#allocation2 + $0x440] sm:$0xf]
    %v1667 = vld [vmem:[#allocation2 + $0x444] sm:$0xff]
    %v1668 = vld [vmem:[#allocation2 + $0x44c] sm:$0xf]
    %v1669 = vld [vmem:[#allocation2 + $0x450] sm:$0xff]
    %v1670 = vld [vmem:[#allocation2 + $0x458] sm:$0xf]
    %v1671 = vld [vmem:[#allocation2 + $0x45c] sm:$0xff]
    %v1672 = vld [vmem:[#allocation2 + $0x464] sm:$0xf]
    %v1673 = vld [vmem:[#allocation2 + $0x468] sm:$0xff]
    %v1674 = vld [vmem:[#allocation2 + $0x470] sm:$0xf]
    %v1675 = vld [vmem:[#allocation2 + $0x474] sm:$0xff]
    %v1676 = vld [vmem:[#allocation2 + $0x47c] sm:$0xf]
    %v1677 = vld [vmem:[#allocation2 + $0x480] sm:$0xff]
    %v1678 = vld [vmem:[#allocation2 + $0x488] sm:$0xf]
    %v1679 = vld [vmem:[#allocation2 + $0x48c] sm:$0xff]
    %v1680 = vld [vmem:[#allocation2 + $0x494] sm:$0xf]
    %v1681 = vld [vmem:[#allocation2 + $0x498] sm:$0xff]
    %v1682 = vld [vmem:[#allocation2 + $0x4a0] sm:$0xf]
    %v1683 = vld [vmem:[#allocation2 + $0x4a4] sm:$0xff]
    %v1684 = vld [vmem:[#allocation2 + $0x4ac] sm:$0xf]
    %v1685 = vld [vmem:[#allocation2 + $0x4b0] sm:$0xff]
    %v1686 = vld [vmem:[#allocation2 + $0x4b8] sm:$0xf]
    %v1687 = vld [vmem:[#allocation2 + $0x4bc] sm:$0xff]
    %v1688 = vld [vmem:[#allocation2 + $0x4c4] sm:$0xf]
    %v1689 = vld [vmem:[#allocation2 + $0x4c8] sm:$0xff]
    %v1690 = vld [vmem:[#allocation2 + $0x4d0] sm:$0xf]
    %v1691 = vld [vmem:[#allocation2 + $0x4d4] sm:$0xff]
    %v1692 = vld [vmem:[#allocation2 + $0x4dc] sm:$0xf]
    %v1693 = vld [vmem:[#allocation2 + $0x4e0] sm:$0xff]
    %v1694 = vld [vmem:[#allocation2 + $0x4e8] sm:$0xf]
    %v1695 = vld [vmem:[#allocation2 + $0x4ec] sm:$0xff]
    %v1696 = vld [vmem:[#allocation2 + $0x4f4] sm:$0xf]
    %v1697 = vld [vmem:[#allocation2 + $0x4f8] sm:$0xff]
    %v1698 = vld [vmem:[#allocation2 + $0x500] sm:$0xf]
    %v1699 = vld [vmem:[#allocation2 + $0x504] sm:$0xff]
    %v1700 = vld [vmem:[#allocation2 + $0x50c] sm:$0xf]
    %v1701 = vld [vmem:[#allocation2 + $0x510] sm:$0xff]
    %v1702 = vld [vmem:[#allocation2 + $0x518] sm:$0xf]
    %v1703 = vld [vmem:[#allocation2 + $0x51c] sm:$0xff]
    %v1704 = vld [vmem:[#allocation2 + $0x524] sm:$0xf]
    %v1705 = vld [vmem:[#allocation2 + $0x528] sm:$0xff]
    %v1706 = vld [vmem:[#allocation2 + $0x530] sm:$0xf]
    %v1707 = vld [vmem:[#allocation2 + $0x534] sm:$0xff]
    %v1708 = vld [vmem:[#allocation2 + $0x53c] sm:$0xf]
    %v1709 = vld [vmem:[#allocation2 + $0x540] sm:$0xff]
    %v1710 = vld [vmem:[#allocation2 + $0x548] sm:$0xf]
    %v1711 = vld [vmem:[#allocation2 + $0x54c] sm:$0xff]
    %v1712 = vld [vmem:[#allocation2 + $0x554] sm:$0xf]
    %v1713 = vld [vmem:[#allocation2 + $0x558] sm:$0xff]
    %v1714 = vld [vmem:[#allocation2 + $0x560] sm:$0xf]
    %v1715 = vld [vmem:[#allocation2 + $0x564] sm:$0xff]
    %v1716 = vld [vmem:[#allocation2 + $0x56c] sm:$0xf]
    %v1717 = vld [vmem:[#allocation2 + $0x570] sm:$0xff]
    %v1718 = vld [vmem:[#allocation2 + $0x578] sm:$0xf]
    %v1719 = vld [vmem:[#allocation2 + $0x57c] sm:$0xff]
    %v1720 = vld [vmem:[#allocation2 + $0x584] sm:$0xf]
    %v1721 = vld [vmem:[#allocation2 + $0x588] sm:$0xff]
    %v1722 = vld [vmem:[#allocation2 + $0x590] sm:$0xf]
    %v1723 = vld [vmem:[#allocation2 + $0x594] sm:$0xff]
    %v1724 = vld [vmem:[#allocation2 + $0x59c] sm:$0xf]
    %v1725 = vpack.c.bf16 %v1626, %v1626
    %v1726 = vpack.c.bf16 %v1627, %v1627
    %v1727 = vpack.c.bf16 %v1628, %v1628
    %v1728 = vld [vmem:[%s4 + $0xa] sm:$0x7]
    %v1730 = vperm.slane %v1728, 0
    %v1731 = vperm.slane %v1728, 1
    %v1732 = vperm.slane %v1728, 2
    %v1832 = vunpack.c.l.b16 %v1629
    %v1833 = vunpack.c.h.b16 %v1629
    %v1834 = vunpack.c.l.b16 %v1630
    %v1835 = vunpack.c.l.b16 %v1631
    %v1836 = vunpack.c.h.b16 %v1631
    %v1837 = vunpack.c.l.b16 %v1632
    %v1838 = vunpack.c.l.b16 %v1633
    %v1839 = vunpack.c.h.b16 %v1633
    %v1840 = vunpack.c.l.b16 %v1634
    %v1841 = vunpack.c.l.b16 %v1635
    %v1842 = vunpack.c.h.b16 %v1635
    %v1843 = vunpack.c.l.b16 %v1636
    %v1844 = vunpack.c.l.b16 %v1637
    %v1845 = vunpack.c.h.b16 %v1637
    %v1846 = vunpack.c.l.b16 %v1638
    %v1847 = vunpack.c.l.b16 %v1639
    %v1848 = vunpack.c.h.b16 %v1639
    %v1849 = vunpack.c.l.b16 %v1640
    %v1850 = vunpack.c.l.b16 %v1641
    %v1851 = vunpack.c.h.b16 %v1641
    %v1852 = vunpack.c.l.b16 %v1642
    %v1853 = vunpack.c.l.b16 %v1643
    %v1854 = vunpack.c.h.b16 %v1643
    %v1855 = vunpack.c.l.b16 %v1644
    %v1856 = vunpack.c.l.b16 %v1645
    %v1857 = vunpack.c.h.b16 %v1645
    %v1858 = vunpack.c.l.b16 %v1646
    %v1859 = vunpack.c.l.b16 %v1647
    %v1860 = vunpack.c.h.b16 %v1647
    %v1861 = vunpack.c.l.b16 %v1648
    %v1862 = vunpack.c.l.b16 %v1649
    %v1863 = vunpack.c.h.b16 %v1649
    %v1864 = vunpack.c.l.b16 %v1650
    %v1865 = vunpack.c.l.b16 %v1651
    %v1866 = vunpack.c.h.b16 %v1651
    %v1867 = vunpack.c.l.b16 %v1652
    %v1868 = vunpack.c.l.b16 %v1653
    %v1869 = vunpack.c.h.b16 %v1653
    %v1870 = vunpack.c.l.b16 %v1654
    %v1871 = vunpack.c.l.b16 %v1655
    %v1872 = vunpack.c.h.b16 %v1655
    %v1873 = vunpack.c.l.b16 %v1656
    %v1874 = vunpack.c.l.b16 %v1657
    %v1875 = vunpack.c.h.b16 %v1657
    %v1876 = vunpack.c.l.b16 %v1658
    %v1877 = vunpack.c.l.b16 %v1659
    %v1878 = vunpack.c.h.b16 %v1659
    %v1879 = vunpack.c.l.b16 %v1660
    %v1880 = vunpack.c.l.b16 %v1661
    %v1881 = vunpack.c.h.b16 %v1661
    %v1882 = vunpack.c.l.b16 %v1662
    %v1883 = vunpack.c.l.b16 %v1663
    %v1884 = vunpack.c.h.b16 %v1663
    %v1885 = vunpack.c.l.b16 %v1664
    %v1886 = vunpack.c.l.b16 %v1665
    %v1887 = vunpack.c.h.b16 %v1665
    %v1888 = vunpack.c.l.b16 %v1666
    %v1889 = vunpack.c.l.b16 %v1667
    %v1890 = vunpack.c.h.b16 %v1667
    %v1891 = vunpack.c.l.b16 %v1668
    %v1892 = vunpack.c.l.b16 %v1669
    %v1893 = vunpack.c.h.b16 %v1669
    %v1894 = vunpack.c.l.b16 %v1670
    %v1895 = vunpack.c.l.b16 %v1671
    %v1896 = vunpack.c.h.b16 %v1671
    %v1897 = vunpack.c.l.b16 %v1672
    %v1898 = vunpack.c.l.b16 %v1673
    %v1899 = vunpack.c.h.b16 %v1673
    %v1900 = vunpack.c.l.b16 %v1674
    %v1901 = vunpack.c.l.b16 %v1675
    %v1902 = vunpack.c.h.b16 %v1675
    %v1903 = vunpack.c.l.b16 %v1676
    %v1904 = vunpack.c.l.b16 %v1677
    %v1905 = vunpack.c.h.b16 %v1677
    %v1906 = vunpack.c.l.b16 %v1678
    %v1907 = vunpack.c.l.b16 %v1679
    %v1908 = vunpack.c.h.b16 %v1679
    %v1909 = vunpack.c.l.b16 %v1680
    %v1910 = vunpack.c.l.b16 %v1681
    %v1911 = vunpack.c.h.b16 %v1681
    %v1912 = vunpack.c.l.b16 %v1682
    %v1913 = vunpack.c.l.b16 %v1683
    %v1914 = vunpack.c.h.b16 %v1683
    %v1915 = vunpack.c.l.b16 %v1684
    %v1916 = vunpack.c.l.b16 %v1685
    %v1917 = vunpack.c.h.b16 %v1685
    %v1918 = vunpack.c.l.b16 %v1686
    %v1919 = vunpack.c.l.b16 %v1687
    %v1920 = vunpack.c.h.b16 %v1687
    %v1921 = vunpack.c.l.b16 %v1688
    %v1922 = vunpack.c.l.b16 %v1689
    %v1923 = vunpack.c.h.b16 %v1689
    %v1924 = vunpack.c.l.b16 %v1690
    %v1925 = vunpack.c.l.b16 %v1691
    %v1926 = vunpack.c.h.b16 %v1691
    %v1927 = vunpack.c.l.b16 %v1692
    %v1928 = vunpack.c.l.b16 %v1693
    %v1929 = vunpack.c.h.b16 %v1693
    %v1930 = vunpack.c.l.b16 %v1694
    %v1931 = vunpack.c.l.b16 %v1695
    %v1932 = vunpack.c.h.b16 %v1695
    %v1933 = vunpack.c.l.b16 %v1696
    %v1934 = vunpack.c.l.b16 %v1697
    %v1935 = vunpack.c.h.b16 %v1697
    %v1936 = vunpack.c.l.b16 %v1698
    %v1937 = vunpack.c.l.b16 %v1699
    %v1938 = vunpack.c.h.b16 %v1699
    %v1939 = vunpack.c.l.b16 %v1700
    %v1940 = vunpack.c.l.b16 %v1701
    %v1941 = vunpack.c.h.b16 %v1701
    %v1942 = vunpack.c.l.b16 %v1702
    %v1943 = vunpack.c.l.b16 %v1703
    %v1944 = vunpack.c.h.b16 %v1703
    %v1945 = vunpack.c.l.b16 %v1704
    %v1946 = vunpack.c.l.b16 %v1705
    %v1947 = vunpack.c.h.b16 %v1705
    %v1948 = vunpack.c.l.b16 %v1706
    %v1949 = vunpack.c.l.b16 %v1707
    %v1950 = vunpack.c.h.b16 %v1707
    %v1951 = vunpack.c.l.b16 %v1708
    %v1952 = vunpack.c.l.b16 %v1709
    %v1953 = vunpack.c.h.b16 %v1709
    %v1954 = vunpack.c.l.b16 %v1710
    %v1955 = vunpack.c.l.b16 %v1711
    %v1956 = vunpack.c.h.b16 %v1711
    %v1957 = vunpack.c.l.b16 %v1712
    %v1958 = vunpack.c.l.b16 %v1713
    %v1959 = vunpack.c.h.b16 %v1713
    %v1960 = vunpack.c.l.b16 %v1714
    %v1961 = vunpack.c.l.b16 %v1715
    %v1962 = vunpack.c.h.b16 %v1715
    %v1963 = vunpack.c.l.b16 %v1716
    %v1964 = vunpack.c.l.b16 %v1717
    %v1965 = vunpack.c.h.b16 %v1717
    %v1966 = vunpack.c.l.b16 %v1718
    %v1967 = vunpack.c.l.b16 %v1719
    %v1968 = vunpack.c.h.b16 %v1719
    %v1969 = vunpack.c.l.b16 %v1720
    %v1970 = vunpack.c.l.b16 %v1721
    %v1971 = vunpack.c.h.b16 %v1721
    %v1972 = vunpack.c.l.b16 %v1722
    %v1973 = vunpack.c.l.b16 %v1723
    %v1974 = vunpack.c.h.b16 %v1723
    %v1975 = vunpack.c.l.b16 %v1724
    %v1976 = vpack.c.b16 %v1835, %v1832
    %v1977 = vpack.c.b16 %v1836, %v1833
    %v1978 = vpack.c.b16 %v1837, %v1834
    %v1979 = vpack.c.b16 %v1841, %v1838
    %v1980 = vpack.c.b16 %v1842, %v1839
    %v1981 = vpack.c.b16 %v1843, %v1840
    %v1982 = vpack.c.b16 %v1847, %v1844
    %v1983 = vpack.c.b16 %v1848, %v1845
    %v1984 = vpack.c.b16 %v1849, %v1846
    %v1985 = vpack.c.b16 %v1853, %v1850
    %v1986 = vpack.c.b16 %v1854, %v1851
    %v1987 = vpack.c.b16 %v1855, %v1852
    %v1988 = vpack.c.b16 %v1859, %v1856
    %v1989 = vpack.c.b16 %v1860, %v1857
    %v1990 = vpack.c.b16 %v1861, %v1858
    %v1991 = vpack.c.b16 %v1865, %v1862
    %v1992 = vpack.c.b16 %v1866, %v1863
    %v1993 = vpack.c.b16 %v1867, %v1864
    %v1994 = vpack.c.b16 %v1871, %v1868
    %v1995 = vpack.c.b16 %v1872, %v1869
    %v1996 = vpack.c.b16 %v1873, %v1870
    %v1997 = vpack.c.b16 %v1877, %v1874
    %v1998 = vpack.c.b16 %v1878, %v1875
    %v1999 = vpack.c.b16 %v1879, %v1876
    %v2000 = vpack.c.b16 %v1883, %v1880
    %v2001 = vpack.c.b16 %v1884, %v1881
    %v2002 = vpack.c.b16 %v1885, %v1882
    %v2003 = vpack.c.b16 %v1889, %v1886
    %v2004 = vpack.c.b16 %v1890, %v1887
    %v2005 = vpack.c.b16 %v1891, %v1888
    %v2006 = vpack.c.b16 %v1895, %v1892
    %v2007 = vpack.c.b16 %v1896, %v1893
    %v2008 = vpack.c.b16 %v1897, %v1894
    %v2009 = vpack.c.b16 %v1901, %v1898
    %v2010 = vpack.c.b16 %v1902, %v1899
    %v2011 = vpack.c.b16 %v1903, %v1900
    %v2012 = vpack.c.b16 %v1907, %v1904
    %v2013 = vpack.c.b16 %v1908, %v1905
    %v2014 = vpack.c.b16 %v1909, %v1906
    %v2015 = vpack.c.b16 %v1913, %v1910
    %v2016 = vpack.c.b16 %v1914, %v1911
    %v2017 = vpack.c.b16 %v1915, %v1912
    %v2018 = vpack.c.b16 %v1919, %v1916
    %v2019 = vpack.c.b16 %v1920, %v1917
    %v2020 = vpack.c.b16 %v1921, %v1918
    %v2021 = vpack.c.b16 %v1925, %v1922
    %v2022 = vpack.c.b16 %v1926, %v1923
    %v2023 = vpack.c.b16 %v1927, %v1924
    %v2024 = vpack.c.b16 %v1931, %v1928
    %v2025 = vpack.c.b16 %v1932, %v1929
    %v2026 = vpack.c.b16 %v1933, %v1930
    %v2027 = vpack.c.b16 %v1937, %v1934
    %v2028 = vpack.c.b16 %v1938, %v1935
    %v2029 = vpack.c.b16 %v1939, %v1936
    %v2030 = vpack.c.b16 %v1943, %v1940
    %v2031 = vpack.c.b16 %v1944, %v1941
    %v2032 = vpack.c.b16 %v1945, %v1942
    %v2033 = vpack.c.b16 %v1949, %v1946
    %v2034 = vpack.c.b16 %v1950, %v1947
    %v2035 = vpack.c.b16 %v1951, %v1948
    %v2036 = vpack.c.b16 %v1955, %v1952
    %v2037 = vpack.c.b16 %v1956, %v1953
    %v2038 = vpack.c.b16 %v1957, %v1954
    %v2039 = vpack.c.b16 %v1961, %v1958
    %v2040 = vpack.c.b16 %v1962, %v1959
    %v2041 = vpack.c.b16 %v1963, %v1960
    %v2042 = vpack.c.b16 %v1967, %v1964
    %v2043 = vpack.c.b16 %v1968, %v1965
    %v2044 = vpack.c.b16 %v1969, %v1966
    %v2045 = vpack.c.b16 %v1973, %v1970
    %v2046 = vpack.c.b16 %v1974, %v1971
    %v2047 = vpack.c.b16 %v1975, %v1972
    %2120 = vmatpush.bf16.msra.mxu0 %v1997
    %2121 = vmatpush.bf16.msra.mxu0 %v1994
    %2122 = vmatpush.bf16.msra.mxu0 %v1991
    %2123 = vmatpush.bf16.msra.mxu0 %v1988
    %2124 = vmatpush.bf16.msra.mxu0 %v1985
    %2125 = vmatpush.bf16.msra.mxu0 %v1982
    %2126 = vmatpush.bf16.msra.mxu0 %v1979
    %2127 = vmatpush.bf16.msra.mxu0 %v1976
    %2128 = vmatmul.bf16.gmra.mxu0 %v1725
    %v2129 = vpop.f32.mrf.mxu0
    %v2130 = vadd.f32 %v1730, %v2129
    %v2131 = vpop.f32.mrf.mxu0
    %2132 = vdwg.mxu0
    %2133 = vmatpush.bf16.msra.mxu0 %v2021
    %2134 = vmatpush.bf16.msra.mxu0 %v2018
    %2135 = vmatpush.bf16.msra.mxu0 %v2015
    %2136 = vmatpush.bf16.msra.mxu0 %v2012
    %2137 = vmatpush.bf16.msra.mxu0 %v2009
    %2138 = vmatpush.bf16.msra.mxu0 %v2006
    %2139 = vmatpush.bf16.msra.mxu0 %v2003
    %2140 = vmatpush.bf16.msra.mxu0 %v2000
    %2141 = vmatmul.bf16.gmra.mxu0 %v1726
    %v2142 = vpop.f32.mrf.mxu0
    %v2143 = vadd.f32 %v2130, %v2142
    %v2144 = vpop.f32.mrf.mxu0
    %2145 = vdwg.mxu0
    %2146 = vmatpush.bf16.msra.mxu0 %v2045
    %2147 = vmatpush.bf16.msra.mxu0 %v2042
    %2148 = vmatpush.bf16.msra.mxu0 %v2039
    %2149 = vmatpush.bf16.msra.mxu0 %v2036
    %2150 = vmatpush.bf16.msra.mxu0 %v2033
    %2151 = vmatpush.bf16.msra.mxu0 %v2030
    %2152 = vmatpush.bf16.msra.mxu0 %v2027
    %2153 = vmatpush.bf16.msra.mxu0 %v2024
    %2154 = vmatmul.bf16.gmra.mxu0 %v1727
    %v2155 = vpop.f32.mrf.mxu0
    %v2156 = vadd.f32 %v2143, %v2155
    %v2157 = vpop.f32.mrf.mxu0
    %2158 = vdwg.mxu0
    %2159 = vmatpush.bf16.msra.mxu0 %v1998
    %2160 = vmatpush.bf16.msra.mxu0 %v1995
    %2161 = vmatpush.bf16.msra.mxu0 %v1992
    %2162 = vmatpush.bf16.msra.mxu0 %v1989
    %2163 = vmatpush.bf16.msra.mxu0 %v1986
    %2164 = vmatpush.bf16.msra.mxu0 %v1983
    %2165 = vmatpush.bf16.msra.mxu0 %v1980
    %2166 = vmatpush.bf16.msra.mxu0 %v1977
    %2167 = vmatmul.bf16.gmra.mxu0 %v1725
    %v2168 = vpop.f32.mrf.mxu0
    %v2169 = vadd.f32 %v1731, %v2168
    %v2170 = vpop.f32.mrf.mxu0
    %2171 = vdwg.mxu0
    %2172 = vmatpush.bf16.msra.mxu0 %v2022
    %2173 = vmatpush.bf16.msra.mxu0 %v2019
    %2174 = vmatpush.bf16.msra.mxu0 %v2016
    %2175 = vmatpush.bf16.msra.mxu0 %v2013
    %2176 = vmatpush.bf16.msra.mxu0 %v2010
    %2177 = vmatpush.bf16.msra.mxu0 %v2007
    %2178 = vmatpush.bf16.msra.mxu0 %v2004
    %2179 = vmatpush.bf16.msra.mxu0 %v2001
    %2180 = vmatmul.bf16.gmra.mxu0 %v1726
    %v2181 = vpop.f32.mrf.mxu0
    %v2182 = vadd.f32 %v2169, %v2181
    %v2183 = vpop.f32.mrf.mxu0
    %2184 = vdwg.mxu0
    %2185 = vmatpush.bf16.msra.mxu0 %v2046
    %2186 = vmatpush.bf16.msra.mxu0 %v2043
    %2187 = vmatpush.bf16.msra.mxu0 %v2040
    %2188 = vmatpush.bf16.msra.mxu0 %v2037
    %2189 = vmatpush.bf16.msra.mxu0 %v2034
    %2190 = vmatpush.bf16.msra.mxu0 %v2031
    %2191 = vmatpush.bf16.msra.mxu0 %v2028
    %2192 = vmatpush.bf16.msra.mxu0 %v2025
    %2193 = vmatmul.bf16.gmra.mxu0 %v1727
    %v2194 = vpop.f32.mrf.mxu0
    %v2195 = vadd.f32 %v2182, %v2194
    %v2196 = vpop.f32.mrf.mxu0
    %2197 = vdwg.mxu0
    %2198 = vmatpush.bf16.msra.mxu0 %v1999
    %2199 = vmatpush.bf16.msra.mxu0 %v1996
    %2200 = vmatpush.bf16.msra.mxu0 %v1993
    %2201 = vmatpush.bf16.msra.mxu0 %v1990
    %2202 = vmatpush.bf16.msra.mxu0 %v1987
    %2203 = vmatpush.bf16.msra.mxu0 %v1984
    %2204 = vmatpush.bf16.msra.mxu0 %v1981
    %2205 = vmatpush.bf16.msra.mxu0 %v1978
    %2206 = vmatmul.bf16.gmra.mxu0 %v1725
    %v2207 = vpop.f32.mrf.mxu0
    %v2208 = vadd.f32 %v1732, %v2207
    %v2209 = vpop.f32.mrf.mxu0
    %2210 = vdwg.mxu0
    %2211 = vmatpush.bf16.msra.mxu0 %v2023
    %2212 = vmatpush.bf16.msra.mxu0 %v2020
    %2213 = vmatpush.bf16.msra.mxu0 %v2017
    %2214 = vmatpush.bf16.msra.mxu0 %v2014
    %2215 = vmatpush.bf16.msra.mxu0 %v2011
    %2216 = vmatpush.bf16.msra.mxu0 %v2008
    %2217 = vmatpush.bf16.msra.mxu0 %v2005
    %2218 = vmatpush.bf16.msra.mxu0 %v2002
    %2219 = vmatmul.bf16.gmra.mxu0 %v1726
    %v2220 = vpop.f32.mrf.mxu0
    %v2221 = vadd.f32 %v2208, %v2220
    %v2222 = vpop.f32.mrf.mxu0
    %2223 = vdwg.mxu0
    %2224 = vmatpush.bf16.msra.mxu0 %v2047
    %2225 = vmatpush.bf16.msra.mxu0 %v2044
    %2226 = vmatpush.bf16.msra.mxu0 %v2041
    %2227 = vmatpush.bf16.msra.mxu0 %v2038
    %2228 = vmatpush.bf16.msra.mxu0 %v2035
    %2229 = vmatpush.bf16.msra.mxu0 %v2032
    %2230 = vmatpush.bf16.msra.mxu0 %v2029
    %2231 = vmatpush.bf16.msra.mxu0 %v2026
    %2232 = vmatmul.bf16.gmra.mxu0 %v1727
    %v2233 = vpop.f32.mrf.mxu0
    %v2234 = vadd.f32 %v2221, %v2233
    %v2235 = vpop.f32.mrf.mxu0
    %2236 = vdwg.mxu0
    %vm2237 = vcmp.ge.f32.partialorder %v2156, 0.0
    %vm2238 = vcmp.ge.f32.partialorder %v2195, 0.0
    %vm2239 = vcmp.ge.f32.partialorder %v2234, 0.0
    %v2240 = vmul.f32 %v2156, 0.2
    %v2241 = vmul.f32 %v2195, 0.2
    %v2242 = vmul.f32 %v2234, 0.2
    %v2243 = vsel %vm2237, %v2156, %v2240
    %v2244 = vsel %vm2238, %v2195, %v2241
    %v2245 = vsel %vm2239, %v2234, %v2242
    %v2246 = vld [vmem:[%s3 + $0x10] sm:$0xff]
    %v2247 = vld [vmem:[%s3 + $0x18] sm:$0xff]
    %v2248 = vld [vmem:[%s3 + $0x20] sm:$0xff]
    %v2249 = vld [vmem:[%s3 + $0x28] sm:$0xff]
    %v2250 = vld [vmem:[%s3 + $0x30] sm:$0xff]
    %v2251 = vld [vmem:[%s3 + $0x38] sm:$0xff]
    %v2252 = vld [vmem:[%s3 + $0x40] sm:$0xff]
    %v2253 = vld [vmem:[%s3 + $0x48] sm:$0xff]
    %v2254 = vld [vmem:[%s3 + $0x50] sm:$0xff]
    %v2255 = vld [vmem:[%s3 + $0x58] sm:$0xff]
    %v2256 = vld [vmem:[%s3 + $0x60] sm:$0xff]
    %v2257 = vld [vmem:[%s3 + $0x68] sm:$0xff]
    %v2258 = vld [vmem:[%s3 + $0x70] sm:$0xff]
    %v2259 = vld [vmem:[%s3 + $0x78] sm:$0xff]
    %v2260 = vld [vmem:[%s3 + $0x80] sm:$0xff]
    %v2261 = vld [vmem:[%s3 + $0x88] sm:$0xff]
    %v2262 = vld [vmem:[%s3 + $0x90] sm:$0xff]
    %v2263 = vld [vmem:[%s3 + $0x98] sm:$0xff]
    %v2264 = vld [vmem:[%s3 + $0xa0] sm:$0xff]
    %v2265 = vld [vmem:[%s3 + $0xa8] sm:$0xff]
    %v2266 = vld [vmem:[%s3 + $0xb0] sm:$0xff]
    %v2267 = vld [vmem:[%s3 + $0xb8] sm:$0xff]
    %v2268 = vld [vmem:[%s3 + $0xc0] sm:$0xff]
    %v2269 = vld [vmem:[%s3 + $0xc8] sm:$0xff]
    %v2270 = vld [vmem:[%s3 + $0xd0] sm:$0xff]
    %v2271 = vld [vmem:[%s3 + $0xd8] sm:$0xff]
    %v2272 = vld [vmem:[%s3 + $0xe0] sm:$0xff]
    %v2273 = vld [vmem:[%s3 + $0xe8] sm:$0xff]
    %v2274 = vld [vmem:[%s3 + $0xf0] sm:$0xff]
    %v2275 = vld [vmem:[%s3 + $0xf8] sm:$0xff]
    %v2276 = vld [vmem:[%s3 + $0x100] sm:$0xff]
    %v2277 = vld [vmem:[%s3 + $0x108] sm:$0xff]
    %v2278 = vld [vmem:[%s3 + $0x110] sm:$0xff]
    %v2279 = vpack.c.bf16 %v2243, %v2243
    %v2280 = vpack.c.bf16 %v2244, %v2244
    %v2281 = vpack.c.bf16 %v2245, %v2245
    %v2282 = vld [vmem:[%s4 + $0xd] sm:$0x3]
    %v2284 = vperm.slane %v2282, 0
    %v2285 = vperm.slane %v2282, 1
    %v2321 = vunpack.c.l.b16 %v2246
    %v2322 = vunpack.c.h.b16 %v2246
    %v2323 = vunpack.c.l.b16 %v2247
    %v2324 = vunpack.c.h.b16 %v2247
    %v2325 = vunpack.c.l.b16 %v2248
    %v2326 = vunpack.c.h.b16 %v2248
    %v2327 = vunpack.c.l.b16 %v2249
    %v2328 = vunpack.c.h.b16 %v2249
    %v2329 = vunpack.c.l.b16 %v2250
    %v2330 = vunpack.c.h.b16 %v2250
    %v2331 = vunpack.c.l.b16 %v2251
    %v2332 = vunpack.c.h.b16 %v2251
    %v2333 = vunpack.c.l.b16 %v2252
    %v2334 = vunpack.c.h.b16 %v2252
    %v2335 = vunpack.c.l.b16 %v2253
    %v2336 = vunpack.c.h.b16 %v2253
    %v2337 = vunpack.c.l.b16 %v2254
    %v2338 = vunpack.c.h.b16 %v2254
    %v2339 = vunpack.c.l.b16 %v2255
    %v2340 = vunpack.c.h.b16 %v2255
    %v2341 = vunpack.c.l.b16 %v2256
    %v2342 = vunpack.c.h.b16 %v2256
    %v2343 = vunpack.c.l.b16 %v2257
    %v2344 = vunpack.c.h.b16 %v2257
    %v2345 = vunpack.c.l.b16 %v2258
    %v2346 = vunpack.c.h.b16 %v2258
    %v2347 = vunpack.c.l.b16 %v2259
    %v2348 = vunpack.c.h.b16 %v2259
    %v2349 = vunpack.c.l.b16 %v2260
    %v2350 = vunpack.c.h.b16 %v2260
    %v2351 = vunpack.c.l.b16 %v2261
    %v2352 = vunpack.c.h.b16 %v2261
    %v2353 = vunpack.c.l.b16 %v2262
    %v2354 = vunpack.c.h.b16 %v2262
    %v2355 = vunpack.c.l.b16 %v2263
    %v2356 = vunpack.c.h.b16 %v2263
    %v2357 = vunpack.c.l.b16 %v2264
    %v2358 = vunpack.c.h.b16 %v2264
    %v2359 = vunpack.c.l.b16 %v2265
    %v2360 = vunpack.c.h.b16 %v2265
    %v2361 = vunpack.c.l.b16 %v2266
    %v2362 = vunpack.c.h.b16 %v2266
    %v2363 = vunpack.c.l.b16 %v2267
    %v2364 = vunpack.c.h.b16 %v2267
    %v2365 = vunpack.c.l.b16 %v2268
    %v2366 = vunpack.c.h.b16 %v2268
    %v2367 = vunpack.c.l.b16 %v2269
    %v2368 = vunpack.c.h.b16 %v2269
    %v2369 = vunpack.c.l.b16 %v2270
    %v2370 = vunpack.c.h.b16 %v2270
    %v2371 = vunpack.c.l.b16 %v2271
    %v2372 = vunpack.c.h.b16 %v2271
    %v2373 = vunpack.c.l.b16 %v2272
    %v2374 = vunpack.c.h.b16 %v2272
    %v2375 = vunpack.c.l.b16 %v2273
    %v2376 = vunpack.c.h.b16 %v2273
    %v2377 = vunpack.c.l.b16 %v2274
    %v2378 = vunpack.c.h.b16 %v2274
    %v2379 = vunpack.c.l.b16 %v2275
    %v2380 = vunpack.c.h.b16 %v2275
    %v2381 = vunpack.c.l.b16 %v2276
    %v2382 = vunpack.c.h.b16 %v2276
    %v2383 = vunpack.c.l.b16 %v2277
    %v2384 = vunpack.c.h.b16 %v2277
    %v2385 = vunpack.c.l.b16 %v2278
    %v2386 = vunpack.c.h.b16 %v2278
    %v2387 = vpack.c.b16 %v2323, %v2321
    %v2388 = vpack.c.b16 %v2324, %v2322
    %v2389 = vpack.c.b16 %v2327, %v2325
    %v2390 = vpack.c.b16 %v2328, %v2326
    %v2391 = vpack.c.b16 %v2331, %v2329
    %v2392 = vpack.c.b16 %v2332, %v2330
    %v2393 = vpack.c.b16 %v2335, %v2333
    %v2394 = vpack.c.b16 %v2336, %v2334
    %v2395 = vpack.c.b16 %v2339, %v2337
    %v2396 = vpack.c.b16 %v2340, %v2338
    %v2397 = vpack.c.b16 %v2343, %v2341
    %v2398 = vpack.c.b16 %v2344, %v2342
    %v2399 = vpack.c.b16 %v2347, %v2345
    %v2400 = vpack.c.b16 %v2348, %v2346
    %v2401 = vpack.c.b16 %v2351, %v2349
    %v2402 = vpack.c.b16 %v2352, %v2350
    %v2403 = vpack.c.b16 %v2355, %v2353
    %v2404 = vpack.c.b16 %v2356, %v2354
    %v2405 = vpack.c.b16 %v2359, %v2357
    %v2406 = vpack.c.b16 %v2360, %v2358
    %v2407 = vpack.c.b16 %v2363, %v2361
    %v2408 = vpack.c.b16 %v2364, %v2362
    %v2409 = vpack.c.b16 %v2367, %v2365
    %v2410 = vpack.c.b16 %v2368, %v2366
    %v2411 = vpack.c.b16 %v2371, %v2369
    %v2412 = vpack.c.b16 %v2372, %v2370
    %v2413 = vpack.c.b16 %v2375, %v2373
    %v2414 = vpack.c.b16 %v2376, %v2374
    %v2415 = vpack.c.b16 %v2379, %v2377
    %v2416 = vpack.c.b16 %v2380, %v2378
    %v2417 = vpack.c.b16 %v2383, %v2381
    %v2418 = vpack.c.b16 %v2384, %v2382
    %v2419 = vpack.c.b16 %v2385, %v2385
    %v2420 = vpack.c.b16 %v2386, %v2386
    %vm2453 = vcmask 64512
    %v2455 = vsel %vm2453, %v2281, 0
    %vm2457 = vcmask 1043456
    %v2459 = vsel %vm2457, %v2419, 0
    %v2462 = vsel %vm2457, %v2420, 0
    %2464 = vmatpush.bf16.msra.mxu0 %v2401
    %2465 = vmatpush.bf16.msra.mxu0 %v2399
    %2466 = vmatpush.bf16.msra.mxu0 %v2397
    %2467 = vmatpush.bf16.msra.mxu0 %v2395
    %2468 = vmatpush.bf16.msra.mxu0 %v2393
    %2469 = vmatpush.bf16.msra.mxu0 %v2391
    %2470 = vmatpush.bf16.msra.mxu0 %v2389
    %2471 = vmatpush.bf16.msra.mxu0 %v2387
    %2472 = vmatmul.bf16.gmra.mxu0 %v2279
    %v2473 = vpop.f32.mrf.mxu0
    %v2474 = vadd.f32 %v2284, %v2473
    %v2475 = vpop.f32.mrf.mxu0
    %2476 = vdwg.mxu0
    %2477 = vmatpush.bf16.msra.mxu0 %v2417
    %2478 = vmatpush.bf16.msra.mxu0 %v2415
    %2479 = vmatpush.bf16.msra.mxu0 %v2413
    %2480 = vmatpush.bf16.msra.mxu0 %v2411
    %2481 = vmatpush.bf16.msra.mxu0 %v2409
    %2482 = vmatpush.bf16.msra.mxu0 %v2407
    %2483 = vmatpush.bf16.msra.mxu0 %v2405
    %2484 = vmatpush.bf16.msra.mxu0 %v2403
    %2485 = vmatmul.bf16.gmra.mxu0 %v2280
    %v2486 = vpop.f32.mrf.mxu0
    %v2487 = vadd.f32 %v2474, %v2486
    %v2488 = vpop.f32.mrf.mxu0
    %2489 = vdwg.mxu0
    %2490 = vmatpush.bf16.msra.mxu0 0
    %2491 = vmatpush.bf16.msra.mxu0 0
    %2492 = vmatpush.bf16.msra.mxu0 0
    %2493 = vmatpush.bf16.msra.mxu0 0
    %2494 = vmatpush.bf16.msra.mxu0 0
    %2495 = vmatpush.bf16.msra.mxu0 0
    %2496 = vmatpush.bf16.msra.mxu0 0
    %2497 = vmatpush.bf16.msra.mxu0 %v2459
    %2498 = vmatmul.bf16.gmra.mxu0 %v2455
    %v2499 = vpop.f32.mrf.mxu0
    %v2500 = vadd.f32 %v2487, %v2499
    %v2501 = vpop.f32.mrf.mxu0
    %2502 = vdwg.mxu0
    %2503 = vmatpush.bf16.msra.mxu0 %v2402
    %2504 = vmatpush.bf16.msra.mxu0 %v2400
    %2505 = vmatpush.bf16.msra.mxu0 %v2398
    %2506 = vmatpush.bf16.msra.mxu0 %v2396
    %2507 = vmatpush.bf16.msra.mxu0 %v2394
    %2508 = vmatpush.bf16.msra.mxu0 %v2392
    %2509 = vmatpush.bf16.msra.mxu0 %v2390
    %2510 = vmatpush.bf16.msra.mxu0 %v2388
    %2511 = vmatmul.bf16.gmra.mxu0 %v2279
    %v2512 = vpop.f32.mrf.mxu0
    %v2513 = vadd.f32 %v2285, %v2512
    %v2514 = vpop.f32.mrf.mxu0
    %2515 = vdwg.mxu0
    %2516 = vmatpush.bf16.msra.mxu0 %v2418
    %2517 = vmatpush.bf16.msra.mxu0 %v2416
    %2518 = vmatpush.bf16.msra.mxu0 %v2414
    %2519 = vmatpush.bf16.msra.mxu0 %v2412
    %2520 = vmatpush.bf16.msra.mxu0 %v2410
    %2521 = vmatpush.bf16.msra.mxu0 %v2408
    %2522 = vmatpush.bf16.msra.mxu0 %v2406
    %2523 = vmatpush.bf16.msra.mxu0 %v2404
    %2524 = vmatmul.bf16.gmra.mxu0 %v2280
    %v2525 = vpop.f32.mrf.mxu0
    %v2526 = vadd.f32 %v2513, %v2525
    %v2527 = vpop.f32.mrf.mxu0
    %2528 = vdwg.mxu0
    %2529 = vmatpush.bf16.msra.mxu0 0
    %2530 = vmatpush.bf16.msra.mxu0 0
    %2531 = vmatpush.bf16.msra.mxu0 0
    %2532 = vmatpush.bf16.msra.mxu0 0
    %2533 = vmatpush.bf16.msra.mxu0 0
    %2534 = vmatpush.bf16.msra.mxu0 0
    %2535 = vmatpush.bf16.msra.mxu0 0
    %2536 = vmatpush.bf16.msra.mxu0 %v2462
    %2537 = vmatmul.bf16.gmra.mxu0 %v2455
    %v2538 = vpop.f32.mrf.mxu0
    %v2539 = vadd.f32 %v2526, %v2538
    %v2540 = vpop.f32.mrf.mxu0
    %2541 = vdwg.mxu0
    %vm2542 = vcmp.ge.f32.partialorder %v2500, 0.0
    %vm2543 = vcmp.ge.f32.partialorder %v2539, 0.0
    %v2544 = vmul.f32 %v2500, 0.2
    %v2545 = vmul.f32 %v2539, 0.2
    %v2546 = vsel %vm2542, %v2500, %v2544
    %v2547 = vsel %vm2543, %v2539, %v2545
    %v2548 = vld [vmem:[%s3 + $0x120] sm:$0xf]
    %v2549 = vld [vmem:[%s3 + $0x128] sm:$0xf]
    %v2550 = vld [vmem:[%s3 + $0x130] sm:$0xf]
    %v2551 = vld [vmem:[%s3 + $0x138] sm:$0xf]
    %v2552 = vld [vmem:[%s3 + $0x140] sm:$0xf]
    %v2553 = vld [vmem:[%s3 + $0x148] sm:$0xf]
    %v2554 = vld [vmem:[%s3 + $0x150] sm:$0xf]
    %v2555 = vld [vmem:[%s3 + $0x158] sm:$0xf]
    %v2556 = vld [vmem:[%s3 + $0x160] sm:$0xf]
    %v2557 = vld [vmem:[%s3 + $0x168] sm:$0xf]
    %v2558 = vld [vmem:[%s3 + $0x170] sm:$0xf]
    %v2559 = vld [vmem:[%s3 + $0x178] sm:$0xf]
    %v2560 = vld [vmem:[%s3 + $0x180] sm:$0xf]
    %v2561 = vld [vmem:[%s3 + $0x188] sm:$0xf]
    %v2562 = vld [vmem:[%s3 + $0x190] sm:$0xf]
    %v2563 = vld [vmem:[%s3 + $0x198] sm:$0xf]
    %v2564 = vld [vmem:[%s3 + $0x1a0] sm:$0xf]
    %v2565 = vld [vmem:[%s3 + $0x1a8] sm:$0xf]
    %v2566 = vld [vmem:[%s3 + $0x1b0] sm:$0xf]
    %v2567 = vld [vmem:[%s3 + $0x1b8] sm:$0xf]
    %v2568 = vpack.c.bf16 %v2546, %v2546
    %v2569 = vpack.c.bf16 %v2547, %v2547
    %v2570 = vld [vmem:[%s4 + $0xf] sm:$0x1]
    %v2572 = vperm.slane %v2570, 0
    %v2594 = vunpack.c.l.b16 %v2548
    %v2595 = vunpack.c.l.b16 %v2549
    %v2596 = vunpack.c.l.b16 %v2550
    %v2597 = vunpack.c.l.b16 %v2551
    %v2598 = vunpack.c.l.b16 %v2552
    %v2599 = vunpack.c.l.b16 %v2553
    %v2600 = vunpack.c.l.b16 %v2554
    %v2601 = vunpack.c.l.b16 %v2555
    %v2602 = vunpack.c.l.b16 %v2556
    %v2603 = vunpack.c.l.b16 %v2557
    %v2604 = vunpack.c.l.b16 %v2558
    %v2605 = vunpack.c.l.b16 %v2559
    %v2606 = vunpack.c.l.b16 %v2560
    %v2607 = vunpack.c.l.b16 %v2561
    %v2608 = vunpack.c.l.b16 %v2562
    %v2609 = vunpack.c.l.b16 %v2563
    %v2610 = vunpack.c.l.b16 %v2564
    %v2611 = vunpack.c.l.b16 %v2565
    %v2612 = vunpack.c.l.b16 %v2566
    %v2613 = vunpack.c.l.b16 %v2567
    %v2614 = vpack.c.b16 %v2595, %v2594
    %v2615 = vpack.c.b16 %v2597, %v2596
    %v2616 = vpack.c.b16 %v2599, %v2598
    %v2617 = vpack.c.b16 %v2601, %v2600
    %v2618 = vpack.c.b16 %v2603, %v2602
    %v2619 = vpack.c.b16 %v2605, %v2604
    %v2620 = vpack.c.b16 %v2607, %v2606
    %v2621 = vpack.c.b16 %v2609, %v2608
    %v2622 = vpack.c.b16 %v2611, %v2610
    %v2623 = vpack.c.b16 %v2613, %v2612
    %v2635 = vsel %vm459, %v2569, 0
    %2637 = vmatpush.bf16.msra.mxu0 %v2621
    %2638 = vmatpush.bf16.msra.mxu0 %v2620
    %2639 = vmatpush.bf16.msra.mxu0 %v2619
    %2640 = vmatpush.bf16.msra.mxu0 %v2618
    %2641 = vmatpush.bf16.msra.mxu0 %v2617
    %2642 = vmatpush.bf16.msra.mxu0 %v2616
    %2643 = vmatpush.bf16.msra.mxu0 %v2615
    %2644 = vmatpush.bf16.msra.mxu0 %v2614
    %2645 = vmatmul.bf16.gmra.mxu0 %v2568
    %v2646 = vpop.f32.mrf.mxu0
    %v2647 = vadd.f32 %v2572, %v2646
    %v2648 = vpop.f32.mrf.mxu0
    %2649 = vdwg.mxu0
    %2650 = vmatpush.bf16.msra.mxu0 0
    %2651 = vmatpush.bf16.msra.mxu0 0
    %2652 = vmatpush.bf16.msra.mxu0 0
    %2653 = vmatpush.bf16.msra.mxu0 0
    %2654 = vmatpush.bf16.msra.mxu0 0
    %2655 = vmatpush.bf16.msra.mxu0 0
    %2656 = vmatpush.bf16.msra.mxu0 %v2623
    %2657 = vmatpush.bf16.msra.mxu0 %v2622
    %2658 = vmatmul.bf16.gmra.mxu0 %v2635
    %v2659 = vpop.f32.mrf.mxu0
    %v2660 = vadd.f32 %v2647, %v2659
    %v2661 = vpop.f32.mrf.mxu0
    %2662 = vdwg.mxu0
    %v2663 = vmul.f32 %v2660, 0.16666667
    %v2664 = vadd.f32 %v2663, 0.5
    %v2665 = vmax.f32 %v2664, 0.0
    %v2666 = vmin.f32 %v2665, 1.0
    %vm2667 = vcmask 910336
    %2668 = vst.msk [vmem:[%s5] sm:$0x3] %vm2667, %v2666
    // Predicated region
    $region26: #{model_forward.1} parent=1 // pred_check
      _
    $region27: #{model_forward.1} parent=1 // pred_check_branch
      %2670 = sbr.rel (0) target = $region29
    $region28: #{model_forward.1} parent=1 // pred_region
      _
    $region29: #{model_forward.1} parent=1 // pred_fallthru
      _
    // Predicated region
    $region30: #{model_forward.1} parent=1 // pred_check
      _
    $region31: #{model_forward.1} parent=1 // pred_check_branch
      %2672 = sbr.rel (0) target = $region33
    $region32: #{model_forward.1} parent=1 // pred_region
      _
    $region33: #{model_forward.1} parent=1 // pred_fallthru
      _
    %2673 = vsyncpa [#allocation3], 1

</llo_original>
